<compile_context>
chip_gen: v5e
topology: v5e:2x2
jax: 0.10.0
libtpu: 0.0.40
codegen_flags: <defaults>
</compile_context>

<pallas_src>
import functools

import jax
import jax.numpy as jnp
from jax.experimental import pallas as pl
from jax.experimental.pallas import tpu as pltpu


def _elu(x):
    """ELU(alpha=1): x if x > 0 else exp(x) - 1 (exp arg clamped for safety)."""
    return jnp.where(x > 0, x, jnp.exp(jnp.minimum(x, 0.0)) - 1.0)


# --------------------------------------------------------------------------- kernel


def inverted_residual_kernel(x_ref, w1_ref, b1_ref,
                             wdw_ref, b2_ref,
                             w2_ref, wp_ref, bout_ref,
                             o_ref, pad_ref, *, W, Cmid):
    """One grid step processes B depth-slices in a merged (rows, W*C) layout.

    All BN scales are pre-folded into the weight matrices host-side, so the
    kernel only does: matmul -> +shift -> ELU -> DW taps -> +shift -> ELU ->
    two matmuls -> +merged shift -> store.
    """
    B, H, WCin = x_ref.shape
    WCmid = w1_ref.shape[1]
    WCout = o_ref.shape[2]
    cdt = x_ref.dtype          # compute dtype (f32 or bf16); accumulation is f32

    # ---- stage 1: pointwise expansion 1x1x1 conv (+ folded BN scale) + ELU --
    # One matmul for the whole block: M = B*H, K = W*Cin, N = W*Cmid
    # (block-diagonal kron(I_W, w) weight keeps the merged-lane layout).
    x2d = x_ref[...].reshape(B * H, WCin)
    h = jnp.dot(x2d, w1_ref[...], preferred_element_type=jnp.float32)
    h = _elu(h + b1_ref[...])                                   # (B*H, W*Cmid) f32

    # ---- stage 2: depthwise (1,3,3) conv, replicate padding, +shift, ELU ----
    # Replicate-pad into a VMEM scratch: interior + 4 edge copies (no concats,
    # no host-side padded input stream).
    pad_ref[:, 1:H + 1, Cmid:(W + 1) * Cmid] = (
        h.reshape(B, H, WCmid).astype(pad_ref.dtype))
    pad_ref[:, 0:1, Cmid:(W + 1) * Cmid] = pad_ref[:, 1:2, Cmid:(W + 1) * Cmid]
    pad_ref[:, H + 1:H + 2, Cmid:(W + 1) * Cmid] = (
        pad_ref[:, H:H + 1, Cmid:(W + 1) * Cmid])
    pad_ref[:, :, 0:Cmid] = pad_ref[:, :, Cmid:2 * Cmid]
    pad_ref[:, :, (W + 1) * Cmid:(W + 2) * Cmid] = (
        pad_ref[:, :, W * Cmid:(W + 1) * Cmid])

    # Depthwise conv = 9 VPU multiply-accumulates (per-channel weights, with
    # the BN2 scale already folded in, tiled onto the merged W*Cmid lane
    # axis), accumulated in f32.  The 9-iteration Python loop is fully
    # unrolled with static slice offsets.
    acc = jnp.zeros((B * H, WCmid), jnp.float32)
    for dh in range(3):
        for dw in range(3):
            k = dh * 3 + dw
            tap = pad_ref[:, dh:dh + H, dw * Cmid:(dw + W) * Cmid]
            acc = acc + tap.reshape(B * H, WCmid) * wdw_ref[k:k + 1, :]
    h2 = _elu(acc + b2_ref[...])                                # (B*H, W*Cmid) f32

    # ---- stage 3 + shortcut: two matmuls, one merged shift, residual add ----
    # PW2 (BN3 scale folded) and the shortcut projector (BN4 scale folded);
    # the two BN shifts are merged into a single bout row.  InvertedResidual
    # has NO final activation.  Output lanes = W*Cout (= 128 for W=16,
    # Cout=8) -> dense, unmasked stores.
    y = jnp.dot(h2.astype(cdt), w2_ref[...], preferred_element_type=jnp.float32)
    proj = jnp.dot(x2d, wp_ref[...], preferred_element_type=jnp.float32)
    o_ref[...] = (y + proj + bout_ref[...]).reshape(B, H, WCout).astype(o_ref.dtype)


# --------------------------------------------------------------------------- wrapper


def _per_slice_vmem_bytes(H, W, Cin, Cmid, Cout, itemsize):
    """Rough per-depth-slice VMEM footprint estimate (with (8,128) padding)."""
    lanes = lambda n: -(-n // 128) * 128
    subl = lambda n: -(-n // 8) * 8
    inp = 2 * subl(H) * lanes(W * Cin) * itemsize        # double-buffered input
    out = 2 * subl(H) * lanes(W * Cout) * 4              # double-buffered output (f32)
    pad = subl(H + 2) * lanes((W + 2) * Cmid) * itemsize  # replicate-pad scratch
    tmp = 4 * subl(H) * lanes(W * Cmid) * 4              # h / acc / h2 temporaries
    return inp + out + pad + tmp


def _pick_block_slices(nd, per_slice_bytes, min_steps=4, vmem_budget_bytes=8 << 20):
    """Largest divisor of nd whose block fits the (conservative, v7x-safe)
    VMEM budget while keeping >= min_steps grid steps (2 cores on v7x)."""
    best = 1
    for b in range(1, nd + 1):
        if nd % b != 0:
            continue
        if b > 1 and nd // b < min_steps:
            continue
        if b * per_slice_bytes > vmem_budget_bytes:
            continue
        best = max(best, b)
    return best


def inverted_residual_forward(x_ncdhw, kernel_params, *, block_slices=None,
                              compute_dtype=jnp.float32):
    """x_ncdhw: (N, Cin, D, H, W) f32 -> (N, Cout, D, H, W) f32."""
    (w1s, b1r, wdws, b2r, w2s, wps, boutr) = kernel_params
    N, Cin, D, H, W = x_ncdhw.shape
    WCin, WCmid = w1s.shape
    WCout = w2s.shape[1]
    assert WCin == W * Cin
    Cmid, Cout = WCmid // W, WCout // W
    ND = N * D

    # NCDHW -> (N*D, H, W*C): channels merged into the lane axis so every
    # kernel load/store is lane-dense; only ONE (unpadded) input stream.
    x = jnp.transpose(x_ncdhw, (0, 2, 3, 4, 1)).reshape(ND, H, WCin)
    x = x.astype(compute_dtype)

    if block_slices is None:
        block_slices = _pick_block_slices(
            ND, _per_slice_vmem_bytes(H, W, Cin, Cmid, Cout,
                                      jnp.dtype(compute_dtype).itemsize))
    B = block_slices
    assert ND % B == 0, "block_slices must divide N*D"

    kernel = functools.partial(inverted_residual_kernel, W=W, Cmid=Cmid)

    def const_spec(a):
        return pl.BlockSpec(a.shape, lambda i, _n=a.ndim: (0,) * _n)

    wdt = compute_dtype
    # NOTE: if the activation DMA were still exposed at larger shapes, add
    # pipeline_mode=pl.Buffered(3) to the activation BlockSpec below.
    out = pl.pallas_call(
        kernel,
        out_shape=jax.ShapeDtypeStruct((ND, H, WCout), jnp.float32),
        grid=(ND // B,),
        in_specs=[
            pl.BlockSpec((B, H, WCin), lambda i: (i, 0, 0)),
            const_spec(w1s), const_spec(b1r),
            const_spec(wdws), const_spec(b2r),
            const_spec(w2s), const_spec(wps), const_spec(boutr),
        ],
        out_specs=pl.BlockSpec((B, H, WCout), lambda i: (i, 0, 0)),
        scratch_shapes=[pltpu.VMEM((B, H + 2, (W + 2) * Cmid), compute_dtype)],
        compiler_params=pltpu.CompilerParams(
            dimension_semantics=("parallel",),
            vmem_limit_bytes=32 * 1024 * 1024),
    )(x, w1s.astype(wdt), b1r, wdws, b2r,
      w2s.astype(wdt), wps.astype(wdt), boutr)

    out = out.reshape(N, D, H, W, Cout)
    return jnp.transpose(out, (0, 4, 1, 2, 3))


# --------------------------------------------------------------------------- params


def make_params(key, in_ch, out_ch, W, *, expansion_factor=4, eps=1e-5):
    """Deterministic synthetic parameters; eval-mode BatchNorm folded into
    per-channel scale/shift, and the *scales* further folded into the conv
    weights that the kernel consumes.  Returns (kernel_params, torch_params)."""
    mid_ch = in_ch * expansion_factor
    keys = iter(jax.random.split(key, 20))

    def bn_fold(C):
        gamma = 1.0 + 0.1 * jax.random.normal(next(keys), (C,), jnp.float32)
        beta = 0.1 * jax.random.normal(next(keys), (C,), jnp.float32)
        mean = 0.1 * jax.random.normal(next(keys), (C,), jnp.float32)
        var = jax.random.uniform(next(keys), (C,), jnp.float32, minval=0.5, maxval=1.5)
        scale = gamma / jnp.sqrt(var + eps)
        shift = beta - mean * scale
        return scale, shift

    # PyTorch Conv3d weight layouts (O, I/groups, kD, kH, kW)
    w_pw1 = 0.3 * jax.random.normal(next(keys), (mid_ch, in_ch, 1, 1, 1), jnp.float32)
    w_dw = 0.3 * jax.random.normal(next(keys), (mid_ch, 1, 1, 3, 3), jnp.float32)
    w_pw2 = 0.3 * jax.random.normal(next(keys), (out_ch, mid_ch, 1, 1, 1), jnp.float32)
    w_prj = 0.3 * jax.random.normal(next(keys), (out_ch, in_ch, 1, 1, 1), jnp.float32)

    s1, b1 = bn_fold(mid_ch)   # BN after pointwise expansion
    s2, b2 = bn_fold(mid_ch)   # BN after depthwise conv
    s3, b3 = bn_fold(out_ch)   # BN after pointwise projection
    sp, bp = bn_fold(out_ch)   # BN inside the shortcut projector

    # ---- kernel-side layouts (merged "W*C on lanes", BN scales folded) ------
    eye_w = jnp.eye(W, dtype=jnp.float32)
    w1 = jnp.transpose(w_pw1[:, :, 0, 0, 0], (1, 0))       # (Cin,  Cmid)
    w2 = jnp.transpose(w_pw2[:, :, 0, 0, 0], (1, 0))       # (Cmid, Cout)
    wp = jnp.transpose(w_prj[:, :, 0, 0, 0], (1, 0))       # (Cin,  Cout)

    def tile_row(v):
        return jnp.tile(v, W).reshape(1, W * v.shape[0])

    # Fold eval-mode BN scales into the conv weights (removes full-width VPU
    # multiplies in the kernel); only the per-channel shifts remain.
    w1s = jnp.kron(eye_w, w1) * tile_row(s1)                # (W*Cin,  W*Cmid)
    w2s = jnp.kron(eye_w, w2) * tile_row(s3)                # (W*Cmid, W*Cout)
    wps = jnp.kron(eye_w, wp) * tile_row(sp)                # (W*Cin,  W*Cout)
    wdw_hwc = jnp.transpose(w_dw[:, 0, 0], (1, 2, 0))       # (3, 3, Cmid)
    wdws = (jnp.tile(wdw_hwc, (1, 1, W)).reshape(9, W * mid_ch)
            * tile_row(s2))                                 # (9, W*Cmid)

    kernel_params = (w1s, tile_row(b1),
                     wdws, tile_row(b2),
                     w2s, wps, tile_row(b3 + bp))           # merged output shift
    torch_params = (w_pw1, w_dw, w_pw2, w_prj, s1, b1, s2, b2, s3, b3, sp, bp)
    return kernel_params, torch_params


# --------------------------------------------------------------------------- reference


def reference_forward(x, torch_params):
    """Pure-JAX reference mirroring the PyTorch InvertedResidual forward (NCDHW)."""
    (w_pw1, w_dw, w_pw2, w_prj, s1, b1, s2, b2, s3, b3, sp, bp) = torch_params
    mid_ch = w_dw.shape[0]
    dn = ("NCDHW", "OIDHW", "NCDHW")

    def bn(y, s, b):
        return y * s.reshape(1, -1, 1, 1, 1) + b.reshape(1, -1, 1, 1, 1)

    def pw(y, w):
        return jax.lax.conv_general_dilated(y, w, (1, 1, 1), "VALID",
                                            dimension_numbers=dn)

    h = _elu(bn(pw(x, w_pw1), s1, b1))
    hp = jnp.pad(h, ((0, 0), (0, 0), (0, 0), (1, 1), (1, 1)), mode="edge")
    h = jax.lax.conv_general_dilated(hp, w_dw, (1, 1, 1), "VALID",
                                     dimension_numbers=dn,
                                     feature_group_count=mid_ch)
    h = _elu(bn(h, s2, b2))
    y = bn(pw(h, w_pw2), s3, b3)
    proj = bn(pw(x, w_prj), sp, bp)
    return y + proj        # no final activation in InvertedResidual.forward


# --------------------------------------------------------------------------- main


if __name__ == "__main__":
    # Small shapes consistent with the module defaults: in_ch=4, out_ch=8,
    # kernel_size=3, stride=1, expansion_factor=4 (mid_ch=16).
    N, in_ch, out_ch, D, H, W = 2, 4, 8, 8, 16, 16
    expansion_factor = 4

    key = jax.random.PRNGKey(0)
    kx, kp = jax.random.split(key)
    x = jax.random.normal(kx, (N, in_ch, D, H, W), jnp.float32)
    kernel_params, torch_params = make_params(kp, in_ch, out_ch, W,
                                              expansion_factor=expansion_factor)

    out = jax.block_until_ready(inverted_residual_forward(x, kernel_params))
    assert out.shape == (N, out_ch, D, H, W)

    ref = reference_forward(x, torch_params)
    max_err = float(jnp.max(jnp.abs(out - ref)))
    if not bool(jnp.allclose(out, ref, atol=2e-3, rtol=2e-3)):
        raise AssertionError(f"f32 kernel/reference mismatch, max abs err = {max_err}")

    # bf16 activation/weight path (f32 accumulators), for v6e/v7x MXU rates.
    out_bf16 = jax.block_until_ready(
        inverted_residual_forward(x, kernel_params, compute_dtype=jnp.bfloat16))
    max_err_bf16 = float(jnp.max(jnp.abs(out_bf16 - ref)))
    if not bool(jnp.allclose(out_bf16, ref, atol=1e-1, rtol=1e-1)):
        raise AssertionError(
            f"bf16 kernel/reference mismatch, max abs err = {max_err_bf16}")

    print("KERNEL_OK")
</pallas_src>

<mosaic_0001>
module attributes {stable_mosaic.version = 11 : i64} {
  func.func @inverted_residual_kernel(%arg0: i32, %arg1: memref<4x16x64xf32, #tpu.memory_space<vmem>>, %arg2: memref<64x256xf32, #tpu.memory_space<vmem>>, %arg3: memref<1x256xf32, #tpu.memory_space<vmem>>, %arg4: memref<9x256xf32, #tpu.memory_space<vmem>>, %arg5: memref<1x256xf32, #tpu.memory_space<vmem>>, %arg6: memref<256x128xf32, #tpu.memory_space<vmem>>, %arg7: memref<64x128xf32, #tpu.memory_space<vmem>>, %arg8: memref<1x128xf32, #tpu.memory_space<vmem>>, %arg9: memref<4x16x128xf32, #tpu.memory_space<vmem>>, %arg10: memref<4x18x288xf32, #tpu.memory_space<vmem>>) attributes {dimension_semantics = [#tpu.dimension_semantics<parallel>], iteration_bounds = array<i64: 4>, scalar_prefetch = 0 : i64, scratch_operands = 1 : i64, tpu.core_type = #tpu.core_type<tc>, window_params = [{transform_indices = @transform_0, window_bounds = array<i64: 4, 16, 64>}, {pipeline_mode = #tpu.pipeline_mode<synchronous>, transform_indices = @transform_1, window_bounds = array<i64: 64, 256>}, {pipeline_mode = #tpu.pipeline_mode<synchronous>, transform_indices = @transform_2, window_bounds = array<i64: 1, 256>}, {pipeline_mode = #tpu.pipeline_mode<synchronous>, transform_indices = @transform_3, window_bounds = array<i64: 9, 256>}, {pipeline_mode = #tpu.pipeline_mode<synchronous>, transform_indices = @transform_4, window_bounds = array<i64: 1, 256>}, {pipeline_mode = #tpu.pipeline_mode<synchronous>, transform_indices = @transform_5, window_bounds = array<i64: 256, 128>}, {pipeline_mode = #tpu.pipeline_mode<synchronous>, transform_indices = @transform_6, window_bounds = array<i64: 64, 128>}, {pipeline_mode = #tpu.pipeline_mode<synchronous>, transform_indices = @transform_7, window_bounds = array<i64: 1, 128>}, {transform_indices = @transform_8, window_bounds = array<i64: 4, 16, 128>}]} {
    %c0 = arith.constant 0 : index
    %c0_0 = arith.constant 0 : index
    %c0_1 = arith.constant 0 : index
    %0 = vector.load %arg1[%c0, %c0_0, %c0_1] : memref<4x16x64xf32, #tpu.memory_space<vmem>>, vector<4x16x64xf32>
    %1 = vector.shape_cast %0 : vector<4x16x64xf32> to vector<64x64xf32>
    %c0_2 = arith.constant 0 : index
    %c0_3 = arith.constant 0 : index
    %2 = vector.load %arg2[%c0_2, %c0_3] : memref<64x256xf32, #tpu.memory_space<vmem>>, vector<64x256xf32>
    %cst = arith.constant dense<0.000000e+00> : vector<64x256xf32>
    %3 = tpu.matmul %1, %2, %cst {dimension_numbers = #tpu.dot_dimension_numbers<[1], [0], [0], [1], [0, 0, 1, 1], [], []>} : vector<64x64xf32>, vector<64x256xf32>, vector<64x256xf32> -> vector<64x256xf32>
    %c0_4 = arith.constant 0 : index
    %c0_5 = arith.constant 0 : index
    %4 = vector.load %arg3[%c0_4, %c0_5] : memref<1x256xf32, #tpu.memory_space<vmem>>, vector<1x256xf32>
    %5 = vector.broadcast %4 : vector<1x256xf32> to vector<64x256xf32>
    %6 = arith.addf %3, %5 : vector<64x256xf32>
    %cst_6 = arith.constant 0.000000e+00 : f32
    %7 = vector.broadcast %cst_6 : f32 to vector<64x256xf32>
    %8 = arith.cmpf ogt, %6, %7 : vector<64x256xf32>
    %cst_7 = arith.constant 0.000000e+00 : f32
    %9 = vector.broadcast %cst_7 : f32 to vector<64x256xf32>
    %10 = arith.minimumf %6, %9 : vector<64x256xf32>
    %11 = math.exp %10 : vector<64x256xf32>
    %cst_8 = arith.constant 1.000000e+00 : f32
    %12 = vector.broadcast %cst_8 : f32 to vector<64x256xf32>
    %13 = arith.subf %11, %12 : vector<64x256xf32>
    %14 = arith.select %8, %6, %13 : vector<64x256xi1>, vector<64x256xf32>
    %15 = vector.shape_cast %14 : vector<64x256xf32> to vector<4x16x256xf32>
    %c0_9 = arith.constant 0 : index
    %c1 = arith.constant 1 : index
    %c16 = arith.constant 16 : index
    %16 = vector.load %arg10[%c0_9, %c1, %c16] : memref<4x18x288xf32, #tpu.memory_space<vmem>>, vector<4x16x256xf32>
    tpu.vector_store %arg10[%c0_9, %c1, %c16], %15 {strides = array<i32>} : memref<4x18x288xf32, #tpu.memory_space<vmem>>, vector<4x16x256xf32>,
    %c0_10 = arith.constant 0 : index
    %c1_11 = arith.constant 1 : index
    %c16_12 = arith.constant 16 : index
    %17 = vector.load %arg10[%c0_10, %c1_11, %c16_12] : memref<4x18x288xf32, #tpu.memory_space<vmem>>, vector<4x1x256xf32>
    %c0_13 = arith.constant 0 : index
    %c0_14 = arith.constant 0 : index
    %c16_15 = arith.constant 16 : index
    %18 = vector.load %arg10[%c0_13, %c0_14, %c16_15] : memref<4x18x288xf32, #tpu.memory_space<vmem>>, vector<4x1x256xf32>
    tpu.vector_store %arg10[%c0_13, %c0_14, %c16_15], %17 {strides = array<i32>} : memref<4x18x288xf32, #tpu.memory_space<vmem>>, vector<4x1x256xf32>,
    %c0_16 = arith.constant 0 : index
    %c16_17 = arith.constant 16 : index
    %c16_18 = arith.constant 16 : index
    %19 = vector.load %arg10[%c0_16, %c16_17, %c16_18] : memref<4x18x288xf32, #tpu.memory_space<vmem>>, vector<4x1x256xf32>
    %c0_19 = arith.constant 0 : index
    %c17 = arith.constant 17 : index
    %c16_20 = arith.constant 16 : index
    %20 = vector.load %arg10[%c0_19, %c17, %c16_20] : memref<4x18x288xf32, #tpu.memory_space<vmem>>, vector<4x1x256xf32>
    tpu.vector_store %arg10[%c0_19, %c17, %c16_20], %19 {strides = array<i32>} : memref<4x18x288xf32, #tpu.memory_space<vmem>>, vector<4x1x256xf32>,
    %c0_21 = arith.constant 0 : index
    %c0_22 = arith.constant 0 : index
    %c16_23 = arith.constant 16 : index
    %21 = vector.load %arg10[%c0_21, %c0_22, %c16_23] : memref<4x18x288xf32, #tpu.memory_space<vmem>>, vector<4x18x16xf32>
    %c0_24 = arith.constant 0 : index
    %c0_25 = arith.constant 0 : index
    %c0_26 = arith.constant 0 : index
    %22 = vector.load %arg10[%c0_24, %c0_25, %c0_26] : memref<4x18x288xf32, #tpu.memory_space<vmem>>, vector<4x18x16xf32>
    tpu.vector_store %arg10[%c0_24, %c0_25, %c0_26], %21 {strides = array<i32>} : memref<4x18x288xf32, #tpu.memory_space<vmem>>, vector<4x18x16xf32>,
    %c0_27 = arith.constant 0 : index
    %c0_28 = arith.constant 0 : index
    %c256 = arith.constant 256 : index
    %23 = vector.load %arg10[%c0_27, %c0_28, %c256] : memref<4x18x288xf32, #tpu.memory_space<vmem>>, vector<4x18x16xf32>
    %c0_29 = arith.constant 0 : index
    %c0_30 = arith.constant 0 : index
    %c272 = arith.constant 272 : index
    %24 = vector.load %arg10[%c0_29, %c0_30, %c272] : memref<4x18x288xf32, #tpu.memory_space<vmem>>, vector<4x18x16xf32>
    tpu.vector_store %arg10[%c0_29, %c0_30, %c272], %23 {strides = array<i32>} : memref<4x18x288xf32, #tpu.memory_space<vmem>>, vector<4x18x16xf32>,
    %cst_31 = arith.constant 0.000000e+00 : f32
    %25 = vector.broadcast %cst_31 : f32 to vector<64x256xf32>
    %c0_32 = arith.constant 0 : index
    %c0_33 = arith.constant 0 : index
    %c0_34 = arith.constant 0 : index
    %26 = vector.load %arg10[%c0_32, %c0_33, %c0_34] : memref<4x18x288xf32, #tpu.memory_space<vmem>>, vector<4x16x256xf32>
    %27 = vector.shape_cast %26 : vector<4x16x256xf32> to vector<64x256xf32>
    %c0_35 = arith.constant 0 : index
    %c0_36 = arith.constant 0 : index
    %28 = vector.load %arg4[%c0_35, %c0_36] : memref<9x256xf32, #tpu.memory_space<vmem>>, vector<1x256xf32>
    %29 = vector.broadcast %28 : vector<1x256xf32> to vector<64x256xf32>
    %30 = arith.mulf %27, %29 : vector<64x256xf32>
    %31 = arith.addf %25, %30 : vector<64x256xf32>
    %c0_37 = arith.constant 0 : index
    %c0_38 = arith.constant 0 : index
    %c16_39 = arith.constant 16 : index
    %32 = vector.load %arg10[%c0_37, %c0_38, %c16_39] : memref<4x18x288xf32, #tpu.memory_space<vmem>>, vector<4x16x256xf32>
    %33 = vector.shape_cast %32 : vector<4x16x256xf32> to vector<64x256xf32>
    %c1_40 = arith.constant 1 : index
    %c0_41 = arith.constant 0 : index
    %34 = vector.load %arg4[%c1_40, %c0_41] : memref<9x256xf32, #tpu.memory_space<vmem>>, vector<1x256xf32>
    %35 = vector.broadcast %34 : vector<1x256xf32> to vector<64x256xf32>
    %36 = arith.mulf %33, %35 : vector<64x256xf32>
    %37 = arith.addf %31, %36 : vector<64x256xf32>
    %c0_42 = arith.constant 0 : index
    %c0_43 = arith.constant 0 : index
    %c32 = arith.constant 32 : index
    %38 = vector.load %arg10[%c0_42, %c0_43, %c32] : memref<4x18x288xf32, #tpu.memory_space<vmem>>, vector<4x16x256xf32>
    %39 = vector.shape_cast %38 : vector<4x16x256xf32> to vector<64x256xf32>
    %c2 = arith.constant 2 : index
    %c0_44 = arith.constant 0 : index
    %40 = vector.load %arg4[%c2, %c0_44] : memref<9x256xf32, #tpu.memory_space<vmem>>, vector<1x256xf32>
    %41 = vector.broadcast %40 : vector<1x256xf32> to vector<64x256xf32>
    %42 = arith.mulf %39, %41 : vector<64x256xf32>
    %43 = arith.addf %37, %42 : vector<64x256xf32>
    %c0_45 = arith.constant 0 : index
    %c1_46 = arith.constant 1 : index
    %c0_47 = arith.constant 0 : index
    %44 = vector.load %arg10[%c0_45, %c1_46, %c0_47] : memref<4x18x288xf32, #tpu.memory_space<vmem>>, vector<4x16x256xf32>
    %45 = vector.shape_cast %44 : vector<4x16x256xf32> to vector<64x256xf32>
    %c3 = arith.constant 3 : index
    %c0_48 = arith.constant 0 : index
    %46 = vector.load %arg4[%c3, %c0_48] : memref<9x256xf32, #tpu.memory_space<vmem>>, vector<1x256xf32>
    %47 = vector.broadcast %46 : vector<1x256xf32> to vector<64x256xf32>
    %48 = arith.mulf %45, %47 : vector<64x256xf32>
    %49 = arith.addf %43, %48 : vector<64x256xf32>
    %c0_49 = arith.constant 0 : index
    %c1_50 = arith.constant 1 : index
    %c16_51 = arith.constant 16 : index
    %50 = vector.load %arg10[%c0_49, %c1_50, %c16_51] : memref<4x18x288xf32, #tpu.memory_space<vmem>>, vector<4x16x256xf32>
    %51 = vector.shape_cast %50 : vector<4x16x256xf32> to vector<64x256xf32>
    %c4 = arith.constant 4 : index
    %c0_52 = arith.constant 0 : index
    %52 = vector.load %arg4[%c4, %c0_52] : memref<9x256xf32, #tpu.memory_space<vmem>>, vector<1x256xf32>
    %53 = vector.broadcast %52 : vector<1x256xf32> to vector<64x256xf32>
    %54 = arith.mulf %51, %53 : vector<64x256xf32>
    %55 = arith.addf %49, %54 : vector<64x256xf32>
    %c0_53 = arith.constant 0 : index
    %c1_54 = arith.constant 1 : index
    %c32_55 = arith.constant 32 : index
    %56 = vector.load %arg10[%c0_53, %c1_54, %c32_55] : memref<4x18x288xf32, #tpu.memory_space<vmem>>, vector<4x16x256xf32>
    %57 = vector.shape_cast %56 : vector<4x16x256xf32> to vector<64x256xf32>
    %c5 = arith.constant 5 : index
    %c0_56 = arith.constant 0 : index
    %58 = vector.load %arg4[%c5, %c0_56] : memref<9x256xf32, #tpu.memory_space<vmem>>, vector<1x256xf32>
    %59 = vector.broadcast %58 : vector<1x256xf32> to vector<64x256xf32>
    %60 = arith.mulf %57, %59 : vector<64x256xf32>
    %61 = arith.addf %55, %60 : vector<64x256xf32>
    %c0_57 = arith.constant 0 : index
    %c2_58 = arith.constant 2 : index
    %c0_59 = arith.constant 0 : index
    %62 = vector.load %arg10[%c0_57, %c2_58, %c0_59] : memref<4x18x288xf32, #tpu.memory_space<vmem>>, vector<4x16x256xf32>
    %63 = vector.shape_cast %62 : vector<4x16x256xf32> to vector<64x256xf32>
    %c6 = arith.constant 6 : index
    %c0_60 = arith.constant 0 : index
    %64 = vector.load %arg4[%c6, %c0_60] : memref<9x256xf32, #tpu.memory_space<vmem>>, vector<1x256xf32>
    %65 = vector.broadcast %64 : vector<1x256xf32> to vector<64x256xf32>
    %66 = arith.mulf %63, %65 : vector<64x256xf32>
    %67 = arith.addf %61, %66 : vector<64x256xf32>
    %c0_61 = arith.constant 0 : index
    %c2_62 = arith.constant 2 : index
    %c16_63 = arith.constant 16 : index
    %68 = vector.load %arg10[%c0_61, %c2_62, %c16_63] : memref<4x18x288xf32, #tpu.memory_space<vmem>>, vector<4x16x256xf32>
    %69 = vector.shape_cast %68 : vector<4x16x256xf32> to vector<64x256xf32>
    %c7 = arith.constant 7 : index
    %c0_64 = arith.constant 0 : index
    %70 = vector.load %arg4[%c7, %c0_64] : memref<9x256xf32, #tpu.memory_space<vmem>>, vector<1x256xf32>
    %71 = vector.broadcast %70 : vector<1x256xf32> to vector<64x256xf32>
    %72 = arith.mulf %69, %71 : vector<64x256xf32>
    %73 = arith.addf %67, %72 : vector<64x256xf32>
    %c0_65 = arith.constant 0 : index
    %c2_66 = arith.constant 2 : index
    %c32_67 = arith.constant 32 : index
    %74 = vector.load %arg10[%c0_65, %c2_66, %c32_67] : memref<4x18x288xf32, #tpu.memory_space<vmem>>, vector<4x16x256xf32>
    %75 = vector.shape_cast %74 : vector<4x16x256xf32> to vector<64x256xf32>
    %c8 = arith.constant 8 : index
    %c0_68 = arith.constant 0 : index
    %76 = vector.load %arg4[%c8, %c0_68] : memref<9x256xf32, #tpu.memory_space<vmem>>, vector<1x256xf32>
    %77 = vector.broadcast %76 : vector<1x256xf32> to vector<64x256xf32>
    %78 = arith.mulf %75, %77 : vector<64x256xf32>
    %79 = arith.addf %73, %78 : vector<64x256xf32>
    %c0_69 = arith.constant 0 : index
    %c0_70 = arith.constant 0 : index
    %80 = vector.load %arg5[%c0_69, %c0_70] : memref<1x256xf32, #tpu.memory_space<vmem>>, vector<1x256xf32>
    %81 = vector.broadcast %80 : vector<1x256xf32> to vector<64x256xf32>
    %82 = arith.addf %79, %81 : vector<64x256xf32>
    %cst_71 = arith.constant 0.000000e+00 : f32
    %83 = vector.broadcast %cst_71 : f32 to vector<64x256xf32>
    %84 = arith.cmpf ogt, %82, %83 : vector<64x256xf32>
    %cst_72 = arith.constant 0.000000e+00 : f32
    %85 = vector.broadcast %cst_72 : f32 to vector<64x256xf32>
    %86 = arith.minimumf %82, %85 : vector<64x256xf32>
    %87 = math.exp %86 : vector<64x256xf32>
    %cst_73 = arith.constant 1.000000e+00 : f32
    %88 = vector.broadcast %cst_73 : f32 to vector<64x256xf32>
    %89 = arith.subf %87, %88 : vector<64x256xf32>
    %90 = arith.select %84, %82, %89 : vector<64x256xi1>, vector<64x256xf32>
    %c0_74 = arith.constant 0 : index
    %c0_75 = arith.constant 0 : index
    %91 = vector.load %arg6[%c0_74, %c0_75] : memref<256x128xf32, #tpu.memory_space<vmem>>, vector<256x128xf32>
    %cst_76 = arith.constant dense<0.000000e+00> : vector<64x128xf32>
    %92 = tpu.matmul %90, %91, %cst_76 {dimension_numbers = #tpu.dot_dimension_numbers<[1], [0], [0], [1], [0, 0, 1, 1], [], []>} : vector<64x256xf32>, vector<256x128xf32>, vector<64x128xf32> -> vector<64x128xf32>
    %c0_77 = arith.constant 0 : index
    %c0_78 = arith.constant 0 : index
    %93 = vector.load %arg7[%c0_77, %c0_78] : memref<64x128xf32, #tpu.memory_space<vmem>>, vector<64x128xf32>
    %cst_79 = arith.constant dense<0.000000e+00> : vector<64x128xf32>
    %94 = tpu.matmul %1, %93, %cst_79 {dimension_numbers = #tpu.dot_dimension_numbers<[1], [0], [0], [1], [0, 0, 1, 1], [], []>} : vector<64x64xf32>, vector<64x128xf32>, vector<64x128xf32> -> vector<64x128xf32>
    %95 = arith.addf %92, %94 : vector<64x128xf32>
    %c0_80 = arith.constant 0 : index
    %c0_81 = arith.constant 0 : index
    %96 = vector.load %arg8[%c0_80, %c0_81] : memref<1x128xf32, #tpu.memory_space<vmem>>, vector<1x128xf32>
    %97 = vector.broadcast %96 : vector<1x128xf32> to vector<64x128xf32>
    %98 = arith.addf %95, %97 : vector<64x128xf32>
    %99 = vector.shape_cast %98 : vector<64x128xf32> to vector<4x16x128xf32>
    %c0_82 = arith.constant 0 : index
    %c0_83 = arith.constant 0 : index
    %c0_84 = arith.constant 0 : index
    %100 = vector.load %arg9[%c0_82, %c0_83, %c0_84] : memref<4x16x128xf32, #tpu.memory_space<vmem>>, vector<4x16x128xf32>
    tpu.vector_store %arg9[%c0_82, %c0_83, %c0_84], %99 {strides = array<i32>} : memref<4x16x128xf32, #tpu.memory_space<vmem>>, vector<4x16x128xf32>,
    return
  }
  func.func @transform_0(%arg0: i32) -> (i32, i32, i32) {
    %c0_i32 = arith.constant 0 : i32
    %c0_i32_0 = arith.constant 0 : i32
    %c0_i32_1 = arith.constant 0 : i32
    return %arg0, %c0_i32, %c0_i32_0 : i32, i32, i32
  }
  func.func @transform_1(%arg0: i32) -> (i32, i32) {
    %c0_i32 = arith.constant 0 : i32
    %c0_i32_0 = arith.constant 0 : i32
    %c0_i32_1 = arith.constant 0 : i32
    return %c0_i32, %c0_i32_0 : i32, i32
  }
  func.func @transform_2(%arg0: i32) -> (i32, i32) {
    %c0_i32 = arith.constant 0 : i32
    %c0_i32_0 = arith.constant 0 : i32
    %c0_i32_1 = arith.constant 0 : i32
    return %c0_i32, %c0_i32_0 : i32, i32
  }
  func.func @transform_3(%arg0: i32) -> (i32, i32) {
    %c0_i32 = arith.constant 0 : i32
    %c0_i32_0 = arith.constant 0 : i32
    %c0_i32_1 = arith.constant 0 : i32
    return %c0_i32, %c0_i32_0 : i32, i32
  }
  func.func @transform_4(%arg0: i32) -> (i32, i32) {
    %c0_i32 = arith.constant 0 : i32
    %c0_i32_0 = arith.constant 0 : i32
    %c0_i32_1 = arith.constant 0 : i32
    return %c0_i32, %c0_i32_0 : i32, i32
  }
  func.func @transform_5(%arg0: i32) -> (i32, i32) {
    %c0_i32 = arith.constant 0 : i32
    %c0_i32_0 = arith.constant 0 : i32
    %c0_i32_1 = arith.constant 0 : i32
    return %c0_i32, %c0_i32_0 : i32, i32
  }
  func.func @transform_6(%arg0: i32) -> (i32, i32) {
    %c0_i32 = arith.constant 0 : i32
    %c0_i32_0 = arith.constant 0 : i32
    %c0_i32_1 = arith.constant 0 : i32
    return %c0_i32, %c0_i32_0 : i32, i32
  }
  func.func @transform_7(%arg0: i32) -> (i32, i32) {
    %c0_i32 = arith.constant 0 : i32
    %c0_i32_0 = arith.constant 0 : i32
    %c0_i32_1 = arith.constant 0 : i32
    return %c0_i32, %c0_i32_0 : i32, i32
  }
  func.func @transform_8(%arg0: i32) -> (i32, i32, i32) {
    %c0_i32 = arith.constant 0 : i32
    %c0_i32_0 = arith.constant 0 : i32
    %c0_i32_1 = arith.constant 0 : i32
    return %arg0, %c0_i32, %c0_i32_0 : i32, i32, i32
  }
}

</mosaic_0001>

<llo_original>
// kernel: tpu_custom_call.1
$region0: #{tpu_custom_call.1}
  #allocation0 [shape = 'u32[]', space=smem, size = 0x4, offset = 0x4, fixed_abs, tag = 'smem constant byte address 0x4 - core index']
  #allocation1 [shape = 'u32[72,128]{1,0:T(1,128)}', space=vmem, size = 0x9000, scoped, tag = 'internal scratch']
  #allocation2 [shape = 'f32[4,18,288]{2,1,0:T(8,128)}', space=vmem, size = 0x24000, scoped, tag = 'scratch operand']
  %s0 = inlined_call_operand.hbm [shape: f32[16,16,64], index: 0, kind: input, shape index: {}]
  %s1 = inlined_call_operand.hbm [shape: f32[64,256], index: 1, kind: input, shape index: {}]
  %s2 = inlined_call_operand.hbm [shape: f32[1,256], index: 2, kind: input, shape index: {}]
  %s3 = inlined_call_operand.hbm [shape: f32[9,256], index: 3, kind: input, shape index: {}]
  %s4 = inlined_call_operand.vmem [shape: f32[1,256], index: 4, kind: input, shape index: {}]
  %s5 = inlined_call_operand.hbm [shape: f32[256,128], index: 5, kind: input, shape index: {}]
  %s6 = inlined_call_operand.hbm [shape: f32[64,128], index: 6, kind: input, shape index: {}]
  %s7 = inlined_call_operand.vmem [shape: f32[1,128], index: 7, kind: input, shape index: {}]
  %s8 = inlined_call_operand.hbm [shape: f32[16,16,128], index: 8, kind: output, shape index: {}]
  %s9 = sld [smem:[#allocation0]]
  $region89: #{tpu_custom_call.1} parent=0
    _
  %s11 = ssub.s32 1, %s9
  %s12 = scalar_select 0, %s11, %s9
  $region1: #{tpu_custom_call.1} parent=0
    #allocation3 [shape = 'u8[65536]{0}', space=vmem, size = 0x10000, scoped, tag = 'input window, operand 0']
    #allocation4 [shape = 's32[2]{0}', space=sflag, size = 0x8, scoped, tag = 'scoped memory for tpu_custom_call.1']
    #allocation5 [shape = 's32[2]{0}', space=sflag, size = 0x8, scoped, tag = 'scoped memory for tpu_custom_call.1']
    #allocation6 [shape = 'u8[65536]{0}', space=vmem, size = 0x10000, scoped, tag = 'input window, operand 1, single buffered']
    #allocation7 [shape = 's32[1]{0}', space=sflag, size = 0x4, scoped, tag = 'scoped memory for tpu_custom_call.1']
    #allocation8 [shape = 'u8[1024]{0}', space=vmem, size = 0x400, scoped, tag = 'input window, operand 2, single buffered']
    #allocation9 [shape = 'u8[16384]{0}', space=vmem, size = 0x4000, scoped, tag = 'input window, operand 3, single buffered']
    #allocation10 [shape = 's32[1]{0}', space=sflag, size = 0x4, scoped, tag = 'scoped memory for tpu_custom_call.1']
    #allocation11 [shape = 'u8[131072]{0}', space=vmem, size = 0x20000, scoped, tag = 'input window, operand 5, single buffered']
    #allocation12 [shape = 'u8[32768]{0}', space=vmem, size = 0x8000, scoped, tag = 'input window, operand 6, single buffered']
    #allocation13 [shape = 's32[1]{0}', space=sflag, size = 0x4, scoped, tag = 'scoped memory for tpu_custom_call.1']
    #allocation14 [shape = 'u8[65536]{0}', space=vmem, size = 0x10000, scoped, tag = 'output window, operand 0']
    %13 = vsyncpa [#allocation4], 0
    %s14 = scalar_lea.sflag [#allocation4], 1
    %15 = vsyncpa %s14, 0
    %16 = vsyncpa [#allocation7], 0
    %17 = vsyncpa [#allocation10], 0
    %18 = vsyncpa [#allocation13], 0
    %19 = vsyncpa [#allocation5], 0
    %s20 = scalar_lea.sflag [#allocation5], 1
    %21 = vsyncpa %s20, 0
    loop: start=0, step=1, limit=6
    $region2: #{tpu_custom_call.1} parent=1 // loop_pre_header
      _
    $region3: #{tpu_custom_call.1} parent=1 // loop_header
      %s23 = sphi 0, %s27
      %p24 = scmp.ge.s32.totalorder %s23, 6
      %s33 = sphi 0, %s35
      %s36 = sphi 0, %s33
      %s37 = sphi 0, %s36
      %s53 = sphi 0, %s37
      %s57 = sphi 0, %s57
      %s59 = sphi 0, %s57
      %s60 = sphi 0, %s59
      %s74 = sphi 0, %s60
      %s78 = sphi 0, %s78
      %s80 = sphi 0, %s78
      %s81 = sphi 0, %s80
      %s95 = sphi 0, %s81
      %s99 = sphi 0, %s99
      %s101 = sphi 0, %s99
      %s102 = sphi 0, %s101
      %s116 = sphi 0, %s102
      %s120 = sphi 0, %s120
      %s122 = sphi 0, %s120
      %s123 = sphi 0, %s122
      %s137 = sphi 0, %s123
      %s141 = sphi 0, %s141
      %s143 = sphi 0, %s141
      %s144 = sphi 0, %s143
      %s158 = sphi 0, %s144
      %s162 = sphi 0, %s162
      %s164 = sphi 0, %s162
      %s165 = sphi 0, %s164
      %s179 = sphi 0, %s165
      %s183 = sphi 0, %s183
      %s185 = sphi 0, %s183
      %s186 = sphi 0, %s185
      %s200 = sphi 0, %s186
      %s206 = sphi 0, %s208
      %s209 = sphi 0, %s206
      %s210 = sphi 0, %s209
      %s226 = sphi 0, %s210
    $region4: #{tpu_custom_call.1} parent=1 // loop_header_branch
      %26 = sbr.rel (%p24) target = $region8
    $region5: #{tpu_custom_call.1} parent=1 // loop_body
      %s28 = ssub.s32 %s23, 1
      %s29 = ssub.s32 %s23, 2
      %s30 = sadd.s32 %s23, 1
      %s31 = ssub.s32 %s23, %s30
      %p32 = scmp.eq.s32.totalorder %s31, 0
      %s34 = sadd.s32 %s33, 1
      %s35 = scalar_select %p32, %s33, %s34
      %p38 = pneg %p32
      %p39 = scmp.eq.s32.totalorder %s23, 3
      %p40 = por %p38, %p39
      %p41 = scmp.ne.s32.totalorder %s33, %s36
      %p42 = scmp.eq.s32.totalorder %s23, 0
      %p43 = por %p41, %p42
      %p44 = scmp.ne.s32.totalorder %s33, %s36
      %p45 = scmp.eq.s32.totalorder %s28, 3
      %p46 = por %p44, %p45
      %p47 = scmp.ne.s32.totalorder %s36, %s37
      %p48 = scmp.eq.s32.totalorder %s28, 0
      %p49 = por %p47, %p48
      %p50 = scmp.ne.s32.totalorder %s36, %s37
      %p51 = scmp.eq.s32.totalorder %s29, 3
      %p52 = por %p50, %p51
      %p54 = scmp.ne.s32.totalorder %s37, %s53
      %p55 = scmp.eq.s32.totalorder %s29, 0
      %p56 = por %p54, %p55
      %s58 = sadd.s32 %s57, 1
      %p61 = scmp.eq.s32.totalorder %s23, 3
      %p62 = scmp.ne.s32.totalorder %s57, %s59
      %p63 = scmp.eq.s32.totalorder %s23, 0
      %p64 = por %p62, %p63
      %p65 = scmp.ne.s32.totalorder %s57, %s59
      %p66 = scmp.eq.s32.totalorder %s28, 3
      %p67 = por %p65, %p66
      %p68 = scmp.ne.s32.totalorder %s59, %s60
      %p69 = scmp.eq.s32.totalorder %s28, 0
      %p70 = por %p68, %p69
      %p71 = scmp.ne.s32.totalorder %s59, %s60
      %p72 = scmp.eq.s32.totalorder %s29, 3
      %p73 = por %p71, %p72
      %p75 = scmp.ne.s32.totalorder %s60, %s74
      %p76 = scmp.eq.s32.totalorder %s29, 0
      %p77 = por %p75, %p76
      %s79 = sadd.s32 %s78, 1
      %p82 = scmp.eq.s32.totalorder %s23, 3
      %p83 = scmp.ne.s32.totalorder %s78, %s80
      %p84 = scmp.eq.s32.totalorder %s23, 0
      %p85 = por %p83, %p84
      %p86 = scmp.ne.s32.totalorder %s78, %s80
      %p87 = scmp.eq.s32.totalorder %s28, 3
      %p88 = por %p86, %p87
      %p89 = scmp.ne.s32.totalorder %s80, %s81
      %p90 = scmp.eq.s32.totalorder %s28, 0
      %p91 = por %p89, %p90
      %p92 = scmp.ne.s32.totalorder %s80, %s81
      %p93 = scmp.eq.s32.totalorder %s29, 3
      %p94 = por %p92, %p93
      %p96 = scmp.ne.s32.totalorder %s81, %s95
      %p97 = scmp.eq.s32.totalorder %s29, 0
      %p98 = por %p96, %p97
      %s100 = sadd.s32 %s99, 1
      %p103 = scmp.eq.s32.totalorder %s23, 3
      %p104 = scmp.ne.s32.totalorder %s99, %s101
      %p105 = scmp.eq.s32.totalorder %s23, 0
      %p106 = por %p104, %p105
      %p107 = scmp.ne.s32.totalorder %s99, %s101
      %p108 = scmp.eq.s32.totalorder %s28, 3
      %p109 = por %p107, %p108
      %p110 = scmp.ne.s32.totalorder %s101, %s102
      %p111 = scmp.eq.s32.totalorder %s28, 0
      %p112 = por %p110, %p111
      %p113 = scmp.ne.s32.totalorder %s101, %s102
      %p114 = scmp.eq.s32.totalorder %s29, 3
      %p115 = por %p113, %p114
      %p117 = scmp.ne.s32.totalorder %s102, %s116
      %p118 = scmp.eq.s32.totalorder %s29, 0
      %p119 = por %p117, %p118
      %s121 = sadd.s32 %s120, 1
      %p124 = scmp.eq.s32.totalorder %s23, 3
      %p125 = scmp.ne.s32.totalorder %s120, %s122
      %p126 = scmp.eq.s32.totalorder %s23, 0
      %p127 = por %p125, %p126
      %p128 = scmp.ne.s32.totalorder %s120, %s122
      %p129 = scmp.eq.s32.totalorder %s28, 3
      %p130 = por %p128, %p129
      %p131 = scmp.ne.s32.totalorder %s122, %s123
      %p132 = scmp.eq.s32.totalorder %s28, 0
      %p133 = por %p131, %p132
      %p134 = scmp.ne.s32.totalorder %s122, %s123
      %p135 = scmp.eq.s32.totalorder %s29, 3
      %p136 = por %p134, %p135
      %p138 = scmp.ne.s32.totalorder %s123, %s137
      %p139 = scmp.eq.s32.totalorder %s29, 0
      %p140 = por %p138, %p139
      %s142 = sadd.s32 %s141, 1
      %p145 = scmp.eq.s32.totalorder %s23, 3
      %p146 = scmp.ne.s32.totalorder %s141, %s143
      %p147 = scmp.eq.s32.totalorder %s23, 0
      %p148 = por %p146, %p147
      %p149 = scmp.ne.s32.totalorder %s141, %s143
      %p150 = scmp.eq.s32.totalorder %s28, 3
      %p151 = por %p149, %p150
      %p152 = scmp.ne.s32.totalorder %s143, %s144
      %p153 = scmp.eq.s32.totalorder %s28, 0
      %p154 = por %p152, %p153
      %p155 = scmp.ne.s32.totalorder %s143, %s144
      %p156 = scmp.eq.s32.totalorder %s29, 3
      %p157 = por %p155, %p156
      %p159 = scmp.ne.s32.totalorder %s144, %s158
      %p160 = scmp.eq.s32.totalorder %s29, 0
      %p161 = por %p159, %p160
      %s163 = sadd.s32 %s162, 1
      %p166 = scmp.eq.s32.totalorder %s23, 3
      %p167 = scmp.ne.s32.totalorder %s162, %s164
      %p168 = scmp.eq.s32.totalorder %s23, 0
      %p169 = por %p167, %p168
      %p170 = scmp.ne.s32.totalorder %s162, %s164
      %p171 = scmp.eq.s32.totalorder %s28, 3
      %p172 = por %p170, %p171
      %p173 = scmp.ne.s32.totalorder %s164, %s165
      %p174 = scmp.eq.s32.totalorder %s28, 0
      %p175 = por %p173, %p174
      %p176 = scmp.ne.s32.totalorder %s164, %s165
      %p177 = scmp.eq.s32.totalorder %s29, 3
      %p178 = por %p176, %p177
      %p180 = scmp.ne.s32.totalorder %s165, %s179
      %p181 = scmp.eq.s32.totalorder %s29, 0
      %p182 = por %p180, %p181
      %s184 = sadd.s32 %s183, 1
      %p187 = scmp.eq.s32.totalorder %s23, 3
      %p188 = scmp.ne.s32.totalorder %s183, %s185
      %p189 = scmp.eq.s32.totalorder %s23, 0
      %p190 = por %p188, %p189
      %p191 = scmp.ne.s32.totalorder %s183, %s185
      %p192 = scmp.eq.s32.totalorder %s28, 3
      %p193 = por %p191, %p192
      %p194 = scmp.ne.s32.totalorder %s185, %s186
      %p195 = scmp.eq.s32.totalorder %s28, 0
      %p196 = por %p194, %p195
      %p197 = scmp.ne.s32.totalorder %s185, %s186
      %p198 = scmp.eq.s32.totalorder %s29, 3
      %p199 = por %p197, %p198
      %p201 = scmp.ne.s32.totalorder %s186, %s200
      %p202 = scmp.eq.s32.totalorder %s29, 0
      %p203 = por %p201, %p202
      %s204 = ssub.s32 %s23, %s30
      %p205 = scmp.eq.s32.totalorder %s204, 0
      %s207 = sadd.s32 %s206, 1
      %s208 = scalar_select %p205, %s206, %s207
      %p211 = pneg %p205
      %p212 = scmp.eq.s32.totalorder %s23, 3
      %p213 = por %p211, %p212
      %p214 = scmp.ne.s32.totalorder %s206, %s209
      %p215 = scmp.eq.s32.totalorder %s23, 0
      %p216 = por %p214, %p215
      %p217 = scmp.ne.s32.totalorder %s206, %s209
      %p218 = scmp.eq.s32.totalorder %s28, 3
      %p219 = por %p217, %p218
      %p220 = scmp.ne.s32.totalorder %s209, %s210
      %p221 = scmp.eq.s32.totalorder %s28, 0
      %p222 = por %p220, %p221
      %p223 = scmp.ne.s32.totalorder %s209, %s210
      %p224 = scmp.eq.s32.totalorder %s29, 3
      %p225 = por %p223, %p224
      %p227 = scmp.ne.s32.totalorder %s210, %s226
      %p228 = scmp.eq.s32.totalorder %s29, 0
      %p229 = por %p227, %p228
      %p230 = scmp.le.s32.totalorder 1, %s23
      %p231 = scmp.lt.s32.totalorder %s23, 5
      %p232 = pnand %p230, %p231
      %p233 = pneg %p232
      // Predicated region
      $region9: #{tpu_custom_call.1} parent=5 // pred_check
        _
      $region10: #{tpu_custom_call.1} parent=5 // pred_check_branch
        %235 = sbr.rel (%p232) target = $region12
      $region11: #{tpu_custom_call.1} parent=5 // pred_region
        %s236 = ssub.s32 %s23, 1
        // Predicated region
        $region13: #{tpu_custom_call.1} parent=11 // pred_check
          %p237 = pneg %p70
        $region14: #{tpu_custom_call.1} parent=11 // pred_check_branch
          %239 = sbr.rel (%p237) target = $region16
        $region15: #{tpu_custom_call.1} parent=11 // pred_region
          %241 = vsyncadd [#allocation7], 0
          %s242 = sshll.u32 %s1, 4
          %s243 = int_to_ptr.hbm [resolvable:$true] %s242
          %s244 = sshll.u32 [#allocation6], 4
          %s245 = int_to_ptr.vmem [resolvable:$true] %s244
          %250 = dma.hbm_to_vmem [thread:$0]  %s243, 2048, %s245, [#allocation7], 256, 256, 16
        $region16: #{tpu_custom_call.1} parent=11 // pred_fallthru
          _
        // Predicated region
        $region17: #{tpu_custom_call.1} parent=11 // pred_check
          %p251 = pneg %p91
        $region18: #{tpu_custom_call.1} parent=11 // pred_check_branch
          %253 = sbr.rel (%p251) target = $region20
        $region19: #{tpu_custom_call.1} parent=11 // pred_region
          %255 = vsyncadd [#allocation7], 0
          %s257 = sshll.u32 %s2, 4
          %s258 = int_to_ptr.hbm [resolvable:$true] %s257
          %s259 = sshll.u32 [#allocation8], 4
          %s260 = int_to_ptr.vmem [resolvable:$true] %s259
          %262 = dma.hbm_to_vmem [thread:$0]  %s258, 32, %s260, [#allocation7]
        $region20: #{tpu_custom_call.1} parent=11 // pred_fallthru
          _
        // Predicated region
        $region21: #{tpu_custom_call.1} parent=11 // pred_check
          %p263 = pneg %p112
        $region22: #{tpu_custom_call.1} parent=11 // pred_check_branch
          %265 = sbr.rel (%p263) target = $region24
        $region23: #{tpu_custom_call.1} parent=11 // pred_region
          %267 = vsyncadd [#allocation10], 0
          %s268 = sshll.u32 %s3, 4
          %s269 = int_to_ptr.hbm [resolvable:$true] %s268
          %s270 = sshll.u32 [#allocation9], 4
          %s271 = int_to_ptr.vmem [resolvable:$true] %s270
          %276 = dma.hbm_to_vmem [thread:$0]  %s269, 512, %s271, [#allocation10], 256, 256, 16
        $region24: #{tpu_custom_call.1} parent=11 // pred_fallthru
          _
        // Predicated region
        $region25: #{tpu_custom_call.1} parent=11 // pred_check
          %p277 = pneg %p133
        $region26: #{tpu_custom_call.1} parent=11 // pred_check_branch
          %279 = sbr.rel (%p277) target = $region28
        $region27: #{tpu_custom_call.1} parent=11 // pred_region
          _
        $region28: #{tpu_custom_call.1} parent=11 // pred_fallthru
          _
        // Predicated region
        $region29: #{tpu_custom_call.1} parent=11 // pred_check
          %p280 = pneg %p154
        $region30: #{tpu_custom_call.1} parent=11 // pred_check_branch
          %282 = sbr.rel (%p280) target = $region32
        $region31: #{tpu_custom_call.1} parent=11 // pred_region
          %284 = vsyncadd [#allocation10], 0
          %s285 = sshll.u32 %s5, 4
          %s286 = int_to_ptr.hbm [resolvable:$true] %s285
          %s287 = sshll.u32 [#allocation11], 4
          %s288 = int_to_ptr.vmem [resolvable:$true] %s287
          %293 = dma.hbm_to_vmem [thread:$0]  %s286, 4096, %s288, [#allocation10], 128, 128, 8
        $region32: #{tpu_custom_call.1} parent=11 // pred_fallthru
          _
        // Predicated region
        $region33: #{tpu_custom_call.1} parent=11 // pred_check
          %p294 = pneg %p175
        $region34: #{tpu_custom_call.1} parent=11 // pred_check_branch
          %296 = sbr.rel (%p294) target = $region36
        $region35: #{tpu_custom_call.1} parent=11 // pred_region
          %298 = vsyncadd [#allocation13], 0
          %s299 = sshll.u32 %s6, 4
          %s300 = int_to_ptr.hbm [resolvable:$true] %s299
          %s301 = sshll.u32 [#allocation12], 4
          %s302 = int_to_ptr.vmem [resolvable:$true] %s301
          %307 = dma.hbm_to_vmem [thread:$0]  %s300, 1024, %s302, [#allocation13], 128, 128, 8
        $region36: #{tpu_custom_call.1} parent=11 // pred_fallthru
          _
        // Predicated region
        $region37: #{tpu_custom_call.1} parent=11 // pred_check
          %p308 = pneg %p196
        $region38: #{tpu_custom_call.1} parent=11 // pred_check_branch
          %310 = sbr.rel (%p308) target = $region40
        $region39: #{tpu_custom_call.1} parent=11 // pred_region
          _
        $region40: #{tpu_custom_call.1} parent=11 // pred_fallthru
          _
      $region12: #{tpu_custom_call.1} parent=5 // pred_fallthru
        _
      %p311 = scmp.lt.s32.totalorder %s23, 4
      // Predicated region
      $region41: #{tpu_custom_call.1} parent=5 // pred_check
        %p312 = pneg %p311
      $region42: #{tpu_custom_call.1} parent=5 // pred_check_branch
        %314 = sbr.rel (%p312) target = $region44
      $region43: #{tpu_custom_call.1} parent=5 // pred_region
        // Predicated region
        $region45: #{tpu_custom_call.1} parent=43 // pred_check
          %p315 = pneg %p43
        $region46: #{tpu_custom_call.1} parent=43 // pred_check_branch
          %317 = sbr.rel (%p315) target = $region48
        $region47: #{tpu_custom_call.1} parent=43 // pred_region
          %s318 = sand.u32 %s33, 1
          %s319 = scalar_lea.sflag [#allocation4], %s318
          %s320 = sand.u32 %s33, 1
          %s321 = smul.addr %s320, 64
          %s322 = scalar_lea.vmem [#allocation3], %s321
          %s323 = smul.u32 4, %s23
          %325 = vsyncadd %s319, 0
          %s326 = smul.addr %s323, 2
          %s327 = smul.addr %s326, 8
          %s328 = scalar_lea.hbm %s0, %s327
          %s329 = sshll.u32 %s328, 4
          %s330 = int_to_ptr.hbm [resolvable:$true] %s329
          %s331 = sshll.u32 %s322, 4
          %s332 = int_to_ptr.vmem [resolvable:$true] %s331
          %337 = dma.hbm_to_vmem [thread:$0]  %s330, 1024, %s332, %s319, 128, 128, 8
        $region48: #{tpu_custom_call.1} parent=43 // pred_fallthru
          _
      $region44: #{tpu_custom_call.1} parent=5 // pred_fallthru
        _
      %p338 = scmp.le.s32.totalorder 1, %s23
      %p339 = scmp.lt.s32.totalorder %s23, 5
      %p340 = pnand %p338, %p339
      %p341 = pneg %p340
      // Predicated region
      $region49: #{tpu_custom_call.1} parent=5 // pred_check
        _
      $region50: #{tpu_custom_call.1} parent=5 // pred_check_branch
        %343 = sbr.rel (%p340) target = $region52
      $region51: #{tpu_custom_call.1} parent=5 // pred_region
        %s344 = ssub.s32 %s23, 1
        %s345 = sand.u32 %s36, 1
        %s346 = scalar_lea.sflag [#allocation4], %s345
        %s347 = sand.u32 %s36, 1
        %s348 = smul.addr %s347, 64
        %s349 = scalar_lea.vmem [#allocation3], %s348
        // Predicated region
        $region53: #{tpu_custom_call.1} parent=51 // pred_check
          %p350 = pneg %p49
        $region54: #{tpu_custom_call.1} parent=51 // pred_check_branch
          %352 = sbr.rel (%p350) target = $region56
        $region55: #{tpu_custom_call.1} parent=51 // pred_region
          %354 = dma.done %s346, 1024
        $region56: #{tpu_custom_call.1} parent=51 // pred_fallthru
          _
        // Predicated region
        $region57: #{tpu_custom_call.1} parent=51 // pred_check
          %p355 = pneg %p70
        $region58: #{tpu_custom_call.1} parent=51 // pred_check_branch
          %357 = sbr.rel (%p355) target = $region60
        $region59: #{tpu_custom_call.1} parent=51 // pred_region
          %359 = dma.done [#allocation7], 2048
        $region60: #{tpu_custom_call.1} parent=51 // pred_fallthru
          _
        // Predicated region
        $region61: #{tpu_custom_call.1} parent=51 // pred_check
          %p360 = pneg %p91
        $region62: #{tpu_custom_call.1} parent=51 // pred_check_branch
          %362 = sbr.rel (%p360) target = $region64
        $region63: #{tpu_custom_call.1} parent=51 // pred_region
          %364 = dma.done [#allocation7], 32
        $region64: #{tpu_custom_call.1} parent=51 // pred_fallthru
          _
        // Predicated region
        $region65: #{tpu_custom_call.1} parent=51 // pred_check
          %p365 = pneg %p112
        $region66: #{tpu_custom_call.1} parent=51 // pred_check_branch
          %367 = sbr.rel (%p365) target = $region68
        $region67: #{tpu_custom_call.1} parent=51 // pred_region
          %369 = dma.done [#allocation10], 512
        $region68: #{tpu_custom_call.1} parent=51 // pred_fallthru
          _
        // Predicated region
        $region69: #{tpu_custom_call.1} parent=51 // pred_check
          %p370 = pneg %p154
        $region70: #{tpu_custom_call.1} parent=51 // pred_check_branch
          %372 = sbr.rel (%p370) target = $region72
        $region71: #{tpu_custom_call.1} parent=51 // pred_region
          %374 = dma.done [#allocation10], 4096
        $region72: #{tpu_custom_call.1} parent=51 // pred_fallthru
          _
        // Predicated region
        $region73: #{tpu_custom_call.1} parent=51 // pred_check
          %p375 = pneg %p175
        $region74: #{tpu_custom_call.1} parent=51 // pred_check_branch
          %377 = sbr.rel (%p375) target = $region76
        $region75: #{tpu_custom_call.1} parent=51 // pred_region
          %379 = dma.done [#allocation13], 1024
        $region76: #{tpu_custom_call.1} parent=51 // pred_fallthru
          _
        %s380 = sand.u32 %s36, 1
        %s381 = scalar_lea.sflag [#allocation4], %s380
        %s382 = sand.u32 %s36, 1
        %s383 = smul.addr %s382, 64
        %s384 = scalar_lea.vmem [#allocation3], %s383
        %p385 = pneg %p49
        %p386 = pneg %p46
        %p387 = pneg %p70
        %p388 = pneg %p67
        %p389 = pneg %p91
        %p390 = pneg %p88
        %p391 = pneg %p112
        %p392 = pneg %p109
        %p393 = pneg %p133
        %p394 = pneg %p130
        %p395 = pneg %p154
        %p396 = pneg %p151
        %p397 = pneg %p175
        %p398 = pneg %p172
        %p399 = pneg %p196
        %p400 = pneg %p193
        %p401 = pneg %p222
        %p402 = pneg %p219
        %s403 = sand.u32 %s209, 1
        %s404 = scalar_lea.sflag [#allocation5], %s403
        %s405 = sand.u32 %s209, 1
        %s406 = smul.addr %s405, 64
        %s407 = scalar_lea.vmem [#allocation14], %s406
        %s408 = smul.u32 4, %s28
        %s409 = smul.u32 4, %s28
        %v410 = vld [vmem:[%s349] sm:$0xff]
        %v411 = vld [vmem:[%s349 + $0x8] sm:$0xff]
        %v412 = vld [vmem:[%s349 + $0x10] sm:$0xff]
        %v413 = vld [vmem:[%s349 + $0x18] sm:$0xff]
        %v414 = vld [vmem:[%s349 + $0x20] sm:$0xff]
        %v415 = vld [vmem:[%s349 + $0x28] sm:$0xff]
        %v416 = vld [vmem:[%s349 + $0x30] sm:$0xff]
        %v417 = vld [vmem:[%s349 + $0x38] sm:$0xff]
        %v418 = vld [vmem:[#allocation6] sm:$0xff]
        %v419 = vld [vmem:[#allocation6 + $0x8] sm:$0xff]
        %v420 = vld [vmem:[#allocation6 + $0x10] sm:$0xff]
        %v421 = vld [vmem:[#allocation6 + $0x18] sm:$0xff]
        %v422 = vld [vmem:[#allocation6 + $0x20] sm:$0xff]
        %v423 = vld [vmem:[#allocation6 + $0x28] sm:$0xff]
        %v424 = vld [vmem:[#allocation6 + $0x30] sm:$0xff]
        %v425 = vld [vmem:[#allocation6 + $0x38] sm:$0xff]
        %v426 = vld [vmem:[#allocation6 + $0x40] sm:$0xff]
        %v427 = vld [vmem:[#allocation6 + $0x48] sm:$0xff]
        %v428 = vld [vmem:[#allocation6 + $0x50] sm:$0xff]
        %v429 = vld [vmem:[#allocation6 + $0x58] sm:$0xff]
        %v430 = vld [vmem:[#allocation6 + $0x60] sm:$0xff]
        %v431 = vld [vmem:[#allocation6 + $0x68] sm:$0xff]
        %v432 = vld [vmem:[#allocation6 + $0x70] sm:$0xff]
        %v433 = vld [vmem:[#allocation6 + $0x78] sm:$0xff]
        %v434 = vld [vmem:[#allocation8] sm:$0x3]
        %v436 = vperm.slane %v434, 0
        %v437 = vperm.slane %v434, 1
        %vm440 = vcmask 523264
        %v442 = vsel %vm440, %v410, 0
        %v445 = vsel %vm440, %v411, 0
        %v448 = vsel %vm440, %v412, 0
        %v451 = vsel %vm440, %v413, 0
        %v454 = vsel %vm440, %v414, 0
        %v457 = vsel %vm440, %v415, 0
        %v460 = vsel %vm440, %v416, 0
        %v463 = vsel %vm440, %v417, 0
        %465 = vmatpush.msra.mxu0 0.0
        %466 = vmatpush.msra.mxu0 0.0
        %467 = vmatpush.msra.mxu0 0.0
        %468 = vmatpush.msra.mxu0 0.0
        %469 = vmatpush.msra.mxu0 0.0
        %470 = vmatpush.msra.mxu0 0.0
        %471 = vmatpush.msra.mxu0 0.0
        %472 = vmatpush.msra.mxu0 0.0
        %473 = vmatpush.msra.mxu0 %v432
        %474 = vmatpush.msra.mxu0 %v430
        %475 = vmatpush.msra.mxu0 %v428
        %476 = vmatpush.msra.mxu0 %v426
        %477 = vmatpush.msra.mxu0 %v424
        %478 = vmatpush.msra.mxu0 %v422
        %479 = vmatpush.msra.mxu0 %v420
        %480 = vmatpush.msra.mxu0 %v418
        %481 = vmatmul.f32.gmra.mxu0 %v442
        %v482 = vpop.f32.mrf.mxu0
        %v483 = vadd.f32 %v436, %v482
        %484 = vmatmul.f32.gmra.mxu0 %v445
        %v485 = vpop.f32.mrf.mxu0
        %v486 = vadd.f32 %v436, %v485
        %487 = vmatmul.f32.gmra.mxu0 %v448
        %v488 = vpop.f32.mrf.mxu0
        %v489 = vadd.f32 %v436, %v488
        %490 = vmatmul.f32.gmra.mxu0 %v451
        %v491 = vpop.f32.mrf.mxu0
        %v492 = vadd.f32 %v436, %v491
        %493 = vmatmul.f32.gmra.mxu0 %v454
        %v494 = vpop.f32.mrf.mxu0
        %v495 = vadd.f32 %v436, %v494
        %496 = vmatmul.f32.gmra.mxu0 %v457
        %v497 = vpop.f32.mrf.mxu0
        %v498 = vadd.f32 %v436, %v497
        %499 = vmatmul.f32.gmra.mxu0 %v460
        %v500 = vpop.f32.mrf.mxu0
        %v501 = vadd.f32 %v436, %v500
        %502 = vmatmul.f32.gmra.mxu0 %v463
        %v503 = vpop.f32.mrf.mxu0
        %v504 = vadd.f32 %v436, %v503
        %505 = vdwg.mxu0
        %506 = vmatpush.msra.mxu0 0.0
        %507 = vmatpush.msra.mxu0 0.0
        %508 = vmatpush.msra.mxu0 0.0
        %509 = vmatpush.msra.mxu0 0.0
        %510 = vmatpush.msra.mxu0 0.0
        %511 = vmatpush.msra.mxu0 0.0
        %512 = vmatpush.msra.mxu0 0.0
        %513 = vmatpush.msra.mxu0 0.0
        %514 = vmatpush.msra.mxu0 %v433
        %515 = vmatpush.msra.mxu0 %v431
        %516 = vmatpush.msra.mxu0 %v429
        %517 = vmatpush.msra.mxu0 %v427
        %518 = vmatpush.msra.mxu0 %v425
        %519 = vmatpush.msra.mxu0 %v423
        %520 = vmatpush.msra.mxu0 %v421
        %521 = vmatpush.msra.mxu0 %v419
        %522 = vmatmul.f32.gmra.mxu0 %v442
        %v523 = vpop.f32.mrf.mxu0
        %v524 = vadd.f32 %v437, %v523
        %525 = vmatmul.f32.gmra.mxu0 %v445
        %v526 = vpop.f32.mrf.mxu0
        %v527 = vadd.f32 %v437, %v526
        %528 = vmatmul.f32.gmra.mxu0 %v448
        %v529 = vpop.f32.mrf.mxu0
        %v530 = vadd.f32 %v437, %v529
        %531 = vmatmul.f32.gmra.mxu0 %v451
        %v532 = vpop.f32.mrf.mxu0
        %v533 = vadd.f32 %v437, %v532
        %534 = vmatmul.f32.gmra.mxu0 %v454
        %v535 = vpop.f32.mrf.mxu0
        %v536 = vadd.f32 %v437, %v535
        %537 = vmatmul.f32.gmra.mxu0 %v457
        %v538 = vpop.f32.mrf.mxu0
        %v539 = vadd.f32 %v437, %v538
        %540 = vmatmul.f32.gmra.mxu0 %v460
        %v541 = vpop.f32.mrf.mxu0
        %v542 = vadd.f32 %v437, %v541
        %543 = vmatmul.f32.gmra.mxu0 %v463
        %v544 = vpop.f32.mrf.mxu0
        %v545 = vadd.f32 %v437, %v544
        %546 = vdwg.mxu0
        %vm547 = vcmp.gt.f32.partialorder %v483, 0.0
        %vm548 = vcmp.gt.f32.partialorder %v524, 0.0
        %vm549 = vcmp.gt.f32.partialorder %v486, 0.0
        %vm550 = vcmp.gt.f32.partialorder %v527, 0.0
        %vm551 = vcmp.gt.f32.partialorder %v489, 0.0
        %vm552 = vcmp.gt.f32.partialorder %v530, 0.0
        %vm553 = vcmp.gt.f32.partialorder %v492, 0.0
        %vm554 = vcmp.gt.f32.partialorder %v533, 0.0
        %vm555 = vcmp.gt.f32.partialorder %v495, 0.0
        %vm556 = vcmp.gt.f32.partialorder %v536, 0.0
        %vm557 = vcmp.gt.f32.partialorder %v498, 0.0
        %vm558 = vcmp.gt.f32.partialorder %v539, 0.0
        %vm559 = vcmp.gt.f32.partialorder %v501, 0.0
        %vm560 = vcmp.gt.f32.partialorder %v542, 0.0
        %vm561 = vcmp.gt.f32.partialorder %v504, 0.0
        %vm562 = vcmp.gt.f32.partialorder %v545, 0.0
        %v563 = vmin.f32 %v483, 0.0
        %v564 = vmin.f32 %v524, 0.0
        %v565 = vmin.f32 %v486, 0.0
        %v566 = vmin.f32 %v527, 0.0
        %v567 = vmin.f32 %v489, 0.0
        %v568 = vmin.f32 %v530, 0.0
        %v569 = vmin.f32 %v492, 0.0
        %v570 = vmin.f32 %v533, 0.0
        %v571 = vmin.f32 %v495, 0.0
        %v572 = vmin.f32 %v536, 0.0
        %v573 = vmin.f32 %v498, 0.0
        %v574 = vmin.f32 %v539, 0.0
        %v575 = vmin.f32 %v501, 0.0
        %v576 = vmin.f32 %v542, 0.0
        %v577 = vmin.f32 %v504, 0.0
        %v578 = vmin.f32 %v545, 0.0
        %v579 = vmul.f32 %v563, 1.442695
        %v580 = vpow.pop %v579
        %v581 = vmul.f32 %v564, 1.442695
        %v582 = vpow.pop %v581
        %v583 = vmul.f32 %v565, 1.442695
        %v584 = vpow.pop %v583
        %v585 = vmul.f32 %v566, 1.442695
        %v586 = vpow.pop %v585
        %v587 = vmul.f32 %v567, 1.442695
        %v588 = vpow.pop %v587
        %v589 = vmul.f32 %v568, 1.442695
        %v590 = vpow.pop %v589
        %v591 = vmul.f32 %v569, 1.442695
        %v592 = vpow.pop %v591
        %v593 = vmul.f32 %v570, 1.442695
        %v594 = vpow.pop %v593
        %v595 = vmul.f32 %v571, 1.442695
        %v596 = vpow.pop %v595
        %v597 = vmul.f32 %v572, 1.442695
        %v598 = vpow.pop %v597
        %v599 = vmul.f32 %v573, 1.442695
        %v600 = vpow.pop %v599
        %v601 = vmul.f32 %v574, 1.442695
        %v602 = vpow.pop %v601
        %v603 = vmul.f32 %v575, 1.442695
        %v604 = vpow.pop %v603
        %v605 = vmul.f32 %v576, 1.442695
        %v606 = vpow.pop %v605
        %v607 = vmul.f32 %v577, 1.442695
        %v608 = vpow.pop %v607
        %v609 = vmul.f32 %v578, 1.442695
        %v610 = vpow.pop %v609
        %v611 = vsub.f32 %v580, 1.0
        %v612 = vsub.f32 %v582, 1.0
        %v613 = vsub.f32 %v584, 1.0
        %v614 = vsub.f32 %v586, 1.0
        %v615 = vsub.f32 %v588, 1.0
        %v616 = vsub.f32 %v590, 1.0
        %v617 = vsub.f32 %v592, 1.0
        %v618 = vsub.f32 %v594, 1.0
        %v619 = vsub.f32 %v596, 1.0
        %v620 = vsub.f32 %v598, 1.0
        %v621 = vsub.f32 %v600, 1.0
        %v622 = vsub.f32 %v602, 1.0
        %v623 = vsub.f32 %v604, 1.0
        %v624 = vsub.f32 %v606, 1.0
        %v625 = vsub.f32 %v608, 1.0
        %v626 = vsub.f32 %v610, 1.0
        %v627 = vsel %vm547, %v483, %v611
        %v628 = vsel %vm548, %v524, %v612
        %v629 = vsel %vm549, %v486, %v613
        %v630 = vsel %vm550, %v527, %v614
        %v631 = vsel %vm551, %v489, %v615
        %v632 = vsel %vm552, %v530, %v616
        %v633 = vsel %vm553, %v492, %v617
        %v634 = vsel %vm554, %v533, %v618
        %v635 = vsel %vm555, %v495, %v619
        %v636 = vsel %vm556, %v536, %v620
        %v637 = vsel %vm557, %v498, %v621
        %v638 = vsel %vm558, %v539, %v622
        %v639 = vsel %vm559, %v501, %v623
        %v640 = vsel %vm560, %v542, %v624
        %v641 = vsel %vm561, %v504, %v625
        %v642 = vsel %vm562, %v545, %v626
        %vm659 = vcmask 1040384
        %v660 = vrot.slane %v627, 7
        %v661 = vrot.slane %v628, 7
        %v662 = vrot.slane %v629, 7
        %v663 = vsel %vm659, %v660, %v662
        %v664 = vrot.slane %v630, 7
        %v665 = vsel %vm659, %v661, %v664
        %v666 = vrot.slane %v631, 7
        %v667 = vrot.slane %v632, 7
        %v668 = vrot.slane %v633, 7
        %v669 = vsel %vm659, %v666, %v668
        %v670 = vrot.slane %v634, 7
        %v671 = vsel %vm659, %v667, %v670
        %v672 = vrot.slane %v635, 7
        %v673 = vrot.slane %v636, 7
        %v674 = vrot.slane %v637, 7
        %v675 = vsel %vm659, %v672, %v674
        %v676 = vrot.slane %v638, 7
        %v677 = vsel %vm659, %v673, %v676
        %v678 = vrot.slane %v639, 7
        %v679 = vrot.slane %v640, 7
        %v680 = vrot.slane %v641, 7
        %v681 = vsel %vm659, %v678, %v680
        %v682 = vrot.slane %v642, 7
        %v683 = vsel %vm659, %v679, %v682
        %684 = vrot.lane.b32.xlu0 %v660, 16
        %v685 = vpop.permute.xlu0 %684
        %686 = vrot.lane.b32.xlu0 %v661, 16
        %v687 = vpop.permute.xlu0 %686
        %688 = vrot.lane.b32.xlu0 %v663, 16
        %v689 = vpop.permute.xlu0 %688
        %690 = vrot.lane.b32.xlu0 %v665, 16
        %v691 = vpop.permute.xlu0 %690
        %692 = vrot.lane.b32.xlu0 %v662, 16
        %v693 = vpop.permute.xlu0 %692
        %694 = vrot.lane.b32.xlu0 %v664, 16
        %v695 = vpop.permute.xlu0 %694
        %696 = vrot.lane.b32.xlu0 %v666, 16
        %v697 = vpop.permute.xlu0 %696
        %698 = vrot.lane.b32.xlu0 %v667, 16
        %v699 = vpop.permute.xlu0 %698
        %700 = vrot.lane.b32.xlu0 %v669, 16
        %v701 = vpop.permute.xlu0 %700
        %702 = vrot.lane.b32.xlu0 %v671, 16
        %v703 = vpop.permute.xlu0 %702
        %704 = vrot.lane.b32.xlu0 %v668, 16
        %v705 = vpop.permute.xlu0 %704
        %706 = vrot.lane.b32.xlu0 %v670, 16
        %v707 = vpop.permute.xlu0 %706
        %708 = vrot.lane.b32.xlu0 %v672, 16
        %v709 = vpop.permute.xlu0 %708
        %710 = vrot.lane.b32.xlu0 %v673, 16
        %v711 = vpop.permute.xlu0 %710
        %712 = vrot.lane.b32.xlu0 %v675, 16
        %v713 = vpop.permute.xlu0 %712
        %714 = vrot.lane.b32.xlu0 %v677, 16
        %v715 = vpop.permute.xlu0 %714
        %716 = vrot.lane.b32.xlu0 %v674, 16
        %v717 = vpop.permute.xlu0 %716
        %718 = vrot.lane.b32.xlu0 %v676, 16
        %v719 = vpop.permute.xlu0 %718
        %720 = vrot.lane.b32.xlu0 %v678, 16
        %v721 = vpop.permute.xlu0 %720
        %722 = vrot.lane.b32.xlu0 %v679, 16
        %v723 = vpop.permute.xlu0 %722
        %724 = vrot.lane.b32.xlu0 %v681, 16
        %v725 = vpop.permute.xlu0 %724
        %726 = vrot.lane.b32.xlu0 %v683, 16
        %v727 = vpop.permute.xlu0 %726
        %728 = vrot.lane.b32.xlu0 %v680, 16
        %v729 = vpop.permute.xlu0 %728
        %730 = vrot.lane.b32.xlu0 %v682, 16
        %v731 = vpop.permute.xlu0 %730
        %vm732 = vcmask 130048
        %v733 = vsel %vm732, %v685, %v687
        %v734 = vsel %vm732, %v689, %v691
        %v735 = vsel %vm732, %v693, %v695
        %v736 = vsel %vm732, %v697, %v699
        %v737 = vsel %vm732, %v701, %v703
        %v738 = vsel %vm732, %v705, %v707
        %v739 = vsel %vm732, %v709, %v711
        %v740 = vsel %vm732, %v713, %v715
        %v741 = vsel %vm732, %v717, %v719
        %v742 = vsel %vm732, %v721, %v723
        %v743 = vsel %vm732, %v725, %v727
        %v744 = vsel %vm732, %v729, %v731
        %vm781 = vcmask 1047681
        %782 = vst.msk [vmem:[#allocation2] sm:$0xfe] %vm781, %v685
        %783 = vst [vmem:[#allocation2 + $0x8] sm:$0xfe] %v733
        %vm784 = vcmask 130049
        %785 = vst.msk [vmem:[#allocation2 + $0x10] sm:$0xfe] %vm784, %v687
        %vm786 = vcmask 1047680
        %787 = vst.msk [vmem:[#allocation2 + $0x18] sm:$0xff] %vm786, %v689
        %788 = vst [vmem:[#allocation2 + $0x20] sm:$0xff] %v734
        %789 = vst.msk [vmem:[#allocation2 + $0x28] sm:$0xff] %vm732, %v691
        %vm790 = vcmask 1040512
        %791 = vst.msk [vmem:[#allocation2 + $0x30] sm:$0x1] %vm790, %v693
        %792 = vst [vmem:[#allocation2 + $0x38] sm:$0x1] %v735
        %vm793 = vcmask 122880
        %794 = vst.msk [vmem:[#allocation2 + $0x40] sm:$0x1] %vm793, %v695
        %795 = vst.msk [vmem:[#allocation2 + $0x48] sm:$0xfe] %vm781, %v697
        %796 = vst [vmem:[#allocation2 + $0x50] sm:$0xfe] %v736
        %797 = vst.msk [vmem:[#allocation2 + $0x58] sm:$0xfe] %vm784, %v699
        %798 = vst.msk [vmem:[#allocation2 + $0x60] sm:$0xff] %vm786, %v701
        %799 = vst [vmem:[#allocation2 + $0x68] sm:$0xff] %v737
        %800 = vst.msk [vmem:[#allocation2 + $0x70] sm:$0xff] %vm732, %v703
        %801 = vst.msk [vmem:[#allocation2 + $0x78] sm:$0x1] %vm790, %v705
        %802 = vst [vmem:[#allocation2 + $0x80] sm:$0x1] %v738
        %803 = vst.msk [vmem:[#allocation2 + $0x88] sm:$0x1] %vm793, %v707
        %804 = vst.msk [vmem:[#allocation2 + $0x90] sm:$0xfe] %vm781, %v709
        %805 = vst [vmem:[#allocation2 + $0x98] sm:$0xfe] %v739
        %806 = vst.msk [vmem:[#allocation2 + $0xa0] sm:$0xfe] %vm784, %v711
        %807 = vst.msk [vmem:[#allocation2 + $0xa8] sm:$0xff] %vm786, %v713
        %808 = vst [vmem:[#allocation2 + $0xb0] sm:$0xff] %v740
        %809 = vst.msk [vmem:[#allocation2 + $0xb8] sm:$0xff] %vm732, %v715
        %810 = vst.msk [vmem:[#allocation2 + $0xc0] sm:$0x1] %vm790, %v717
        %811 = vst [vmem:[#allocation2 + $0xc8] sm:$0x1] %v741
        %812 = vst.msk [vmem:[#allocation2 + $0xd0] sm:$0x1] %vm793, %v719
        %813 = vst.msk [vmem:[#allocation2 + $0xd8] sm:$0xfe] %vm781, %v721
        %814 = vst [vmem:[#allocation2 + $0xe0] sm:$0xfe] %v742
        %815 = vst.msk [vmem:[#allocation2 + $0xe8] sm:$0xfe] %vm784, %v723
        %816 = vst.msk [vmem:[#allocation2 + $0xf0] sm:$0xff] %vm786, %v725
        %817 = vst [vmem:[#allocation2 + $0xf8] sm:$0xff] %v743
        %818 = vst.msk [vmem:[#allocation2 + $0x100] sm:$0xff] %vm732, %v727
        %819 = vst.msk [vmem:[#allocation2 + $0x108] sm:$0x1] %vm790, %v729
        %820 = vst [vmem:[#allocation2 + $0x110] sm:$0x1] %v744
        %821 = vst.msk [vmem:[#allocation2 + $0x118] sm:$0x1] %vm793, %v731
        %s822 = scalar_lea.vmem [#allocation2], 1
        %v823 = vld [vmem:[%s822] ss:$8 sm:$0x7]
        %s824 = scalar_lea.vmem [#allocation2], 73
        %v825 = vld [vmem:[%s824] ss:$8 sm:$0x7]
        %s826 = scalar_lea.vmem [#allocation2], 145
        %v827 = vld [vmem:[%s826] ss:$8 sm:$0x7]
        %s828 = scalar_lea.vmem [#allocation2], 217
        %v829 = vld [vmem:[%s828] ss:$8 sm:$0x7]
        %v830 = vlaneseq
        %vm831 = vcmp.ge.s32.totalorder %v830, 16
        %vm832 = vcmp.lt.s32.totalorder %v830, 272
        %vm833 = vmand %vm831, %vm832
        %834 = vst.msk [vmem:[#allocation2] ss:$8 sm:$0x7] %vm833, %v823
        %835 = vst.msk [vmem:[#allocation2] ss:$8 sm:$0x0] %vm833, %v823
        %s836 = scalar_lea.vmem [#allocation2], 72
        %837 = vst.msk [vmem:[%s836] ss:$8 sm:$0x7] %vm833, %v825
        %838 = vst.msk [vmem:[%s836] ss:$8 sm:$0x0] %vm833, %v825
        %s839 = scalar_lea.vmem [#allocation2], 144
        %840 = vst.msk [vmem:[%s839] ss:$8 sm:$0x7] %vm833, %v827
        %841 = vst.msk [vmem:[%s839] ss:$8 sm:$0x0] %vm833, %v827
        %s842 = scalar_lea.vmem [#allocation2], 216
        %843 = vst.msk [vmem:[%s842] ss:$8 sm:$0x7] %vm833, %v829
        %844 = vst.msk [vmem:[%s842] ss:$8 sm:$0x0] %vm833, %v829
        %s845 = scalar_lea.vmem [#allocation2], 48
        %v846 = vld [vmem:[%s845] ss:$8 sm:$0x7]
        %s847 = scalar_lea.vmem [#allocation2], 120
        %v848 = vld [vmem:[%s847] ss:$8 sm:$0x7]
        %s849 = scalar_lea.vmem [#allocation2], 192
        %v850 = vld [vmem:[%s849] ss:$8 sm:$0x7]
        %s851 = scalar_lea.vmem [#allocation2], 264
        %v852 = vld [vmem:[%s851] ss:$8 sm:$0x7]
        %s853 = scalar_lea.vmem [#allocation2], 49
        %854 = vst.msk [vmem:[%s853] ss:$8 sm:$0x7] %vm833, %v846
        %855 = vst.msk [vmem:[%s853] ss:$8 sm:$0x0] %vm833, %v846
        %s856 = scalar_lea.vmem [#allocation2], 121
        %857 = vst.msk [vmem:[%s856] ss:$8 sm:$0x7] %vm833, %v848
        %858 = vst.msk [vmem:[%s856] ss:$8 sm:$0x0] %vm833, %v848
        %s859 = scalar_lea.vmem [#allocation2], 193
        %860 = vst.msk [vmem:[%s859] ss:$8 sm:$0x7] %vm833, %v850
        %861 = vst.msk [vmem:[%s859] ss:$8 sm:$0x0] %vm833, %v850
        %s862 = scalar_lea.vmem [#allocation2], 265
        %863 = vst.msk [vmem:[%s862] ss:$8 sm:$0x7] %vm833, %v852
        %864 = vst.msk [vmem:[%s862] ss:$8 sm:$0x0] %vm833, %v852
        %v865 = vld [vmem:[#allocation2] sm:$0xff]
        %v866 = vld [vmem:[#allocation2 + $0x18] sm:$0xff]
        %v867 = vld [vmem:[#allocation2 + $0x30] sm:$0x3]
        %v868 = vld [vmem:[#allocation2 + $0x48] sm:$0xff]
        %v869 = vld [vmem:[#allocation2 + $0x60] sm:$0xff]
        %v870 = vld [vmem:[#allocation2 + $0x78] sm:$0x3]
        %v871 = vld [vmem:[#allocation2 + $0x90] sm:$0xff]
        %v872 = vld [vmem:[#allocation2 + $0xa8] sm:$0xff]
        %v873 = vld [vmem:[#allocation2 + $0xc0] sm:$0x3]
        %v874 = vld [vmem:[#allocation2 + $0xd8] sm:$0xff]
        %v875 = vld [vmem:[#allocation2 + $0xf0] sm:$0xff]
        %v876 = vld [vmem:[#allocation2 + $0x108] sm:$0x3]
        %889 = vrot.lane.b32.xlu0 %v865, 112
        %v890 = vpop.permute.xlu0 %889
        %891 = vrot.lane.b32.xlu0 %v866, 112
        %v892 = vpop.permute.xlu0 %891
        %893 = vrot.lane.b32.xlu0 %v867, 112
        %v894 = vpop.permute.xlu0 %893
        %895 = vrot.lane.b32.xlu0 %v868, 112
        %v896 = vpop.permute.xlu0 %895
        %897 = vrot.lane.b32.xlu0 %v869, 112
        %v898 = vpop.permute.xlu0 %897
        %899 = vrot.lane.b32.xlu0 %v870, 112
        %v900 = vpop.permute.xlu0 %899
        %901 = vrot.lane.b32.xlu0 %v871, 112
        %v902 = vpop.permute.xlu0 %901
        %903 = vrot.lane.b32.xlu0 %v872, 112
        %v904 = vpop.permute.xlu0 %903
        %905 = vrot.lane.b32.xlu0 %v873, 112
        %v906 = vpop.permute.xlu0 %905
        %907 = vrot.lane.b32.xlu0 %v874, 112
        %v908 = vpop.permute.xlu0 %907
        %909 = vrot.lane.b32.xlu0 %v875, 112
        %v910 = vpop.permute.xlu0 %909
        %911 = vrot.lane.b32.xlu0 %v876, 112
        %v912 = vpop.permute.xlu0 %911
        %925 = vst.msk [vmem:[#allocation2] sm:$0xff] %vm732, %v890
        %926 = vst.msk [vmem:[#allocation2 + $0x18] sm:$0xff] %vm732, %v892
        %vm927 = vcmask 123904
        %928 = vst.msk [vmem:[#allocation2 + $0x30] sm:$0x3] %vm927, %v894
        %929 = vst.msk [vmem:[#allocation2 + $0x48] sm:$0xff] %vm732, %v896
        %930 = vst.msk [vmem:[#allocation2 + $0x60] sm:$0xff] %vm732, %v898
        %931 = vst.msk [vmem:[#allocation2 + $0x78] sm:$0x3] %vm927, %v900
        %932 = vst.msk [vmem:[#allocation2 + $0x90] sm:$0xff] %vm732, %v902
        %933 = vst.msk [vmem:[#allocation2 + $0xa8] sm:$0xff] %vm732, %v904
        %934 = vst.msk [vmem:[#allocation2 + $0xc0] sm:$0x3] %vm927, %v906
        %935 = vst.msk [vmem:[#allocation2 + $0xd8] sm:$0xff] %vm732, %v908
        %936 = vst.msk [vmem:[#allocation2 + $0xf0] sm:$0xff] %vm732, %v910
        %937 = vst.msk [vmem:[#allocation2 + $0x108] sm:$0x3] %vm927, %v912
        %v938 = vld [vmem:[#allocation2 + $0x10] sm:$0xff]
        %v939 = vld [vmem:[#allocation2 + $0x28] sm:$0xff]
        %v940 = vld [vmem:[#allocation2 + $0x40] sm:$0x3]
        %v941 = vld [vmem:[#allocation2 + $0x58] sm:$0xff]
        %v942 = vld [vmem:[#allocation2 + $0x70] sm:$0xff]
        %v943 = vld [vmem:[#allocation2 + $0x88] sm:$0x3]
        %v944 = vld [vmem:[#allocation2 + $0xa0] sm:$0xff]
        %v945 = vld [vmem:[#allocation2 + $0xb8] sm:$0xff]
        %v946 = vld [vmem:[#allocation2 + $0xd0] sm:$0x3]
        %v947 = vld [vmem:[#allocation2 + $0xe8] sm:$0xff]
        %v948 = vld [vmem:[#allocation2 + $0x100] sm:$0xff]
        %v949 = vld [vmem:[#allocation2 + $0x118] sm:$0x3]
        %962 = vrot.lane.b32.xlu0 %v938, 16
        %v963 = vpop.permute.xlu0 %962
        %964 = vrot.lane.b32.xlu0 %v939, 16
        %v965 = vpop.permute.xlu0 %964
        %966 = vrot.lane.b32.xlu0 %v940, 16
        %v967 = vpop.permute.xlu0 %966
        %968 = vrot.lane.b32.xlu0 %v941, 16
        %v969 = vpop.permute.xlu0 %968
        %970 = vrot.lane.b32.xlu0 %v942, 16
        %v971 = vpop.permute.xlu0 %970
        %972 = vrot.lane.b32.xlu0 %v943, 16
        %v973 = vpop.permute.xlu0 %972
        %974 = vrot.lane.b32.xlu0 %v944, 16
        %v975 = vpop.permute.xlu0 %974
        %976 = vrot.lane.b32.xlu0 %v945, 16
        %v977 = vpop.permute.xlu0 %976
        %978 = vrot.lane.b32.xlu0 %v946, 16
        %v979 = vpop.permute.xlu0 %978
        %980 = vrot.lane.b32.xlu0 %v947, 16
        %v981 = vpop.permute.xlu0 %980
        %982 = vrot.lane.b32.xlu0 %v948, 16
        %v983 = vpop.permute.xlu0 %982
        %984 = vrot.lane.b32.xlu0 %v949, 16
        %v985 = vpop.permute.xlu0 %984
        %vm998 = vcmask 261248
        %999 = vst.msk [vmem:[#allocation2 + $0x10] sm:$0xff] %vm998, %v963
        %1000 = vst.msk [vmem:[#allocation2 + $0x28] sm:$0xff] %vm998, %v965
        %vm1001 = vcmask 255104
        %1002 = vst.msk [vmem:[#allocation2 + $0x40] sm:$0x3] %vm1001, %v967
        %1003 = vst.msk [vmem:[#allocation2 + $0x58] sm:$0xff] %vm998, %v969
        %1004 = vst.msk [vmem:[#allocation2 + $0x70] sm:$0xff] %vm998, %v971
        %1005 = vst.msk [vmem:[#allocation2 + $0x88] sm:$0x3] %vm1001, %v973
        %1006 = vst.msk [vmem:[#allocation2 + $0xa0] sm:$0xff] %vm998, %v975
        %1007 = vst.msk [vmem:[#allocation2 + $0xb8] sm:$0xff] %vm998, %v977
        %1008 = vst.msk [vmem:[#allocation2 + $0xd0] sm:$0x3] %vm1001, %v979
        %1009 = vst.msk [vmem:[#allocation2 + $0xe8] sm:$0xff] %vm998, %v981
        %1010 = vst.msk [vmem:[#allocation2 + $0x100] sm:$0xff] %vm998, %v983
        %1011 = vst.msk [vmem:[#allocation2 + $0x118] sm:$0x3] %vm1001, %v985
        %v1012 = vld [vmem:[#allocation2] sm:$0xff]
        %v1013 = vld [vmem:[#allocation2 + $0x8] sm:$0xff]
        %v1014 = vld [vmem:[#allocation2 + $0x18] sm:$0xff]
        %v1015 = vld [vmem:[#allocation2 + $0x20] sm:$0xff]
        %v1016 = vld [vmem:[#allocation2 + $0x48] sm:$0xff]
        %v1017 = vld [vmem:[#allocation2 + $0x50] sm:$0xff]
        %v1018 = vld [vmem:[#allocation2 + $0x60] sm:$0xff]
        %v1019 = vld [vmem:[#allocation2 + $0x68] sm:$0xff]
        %v1020 = vld [vmem:[#allocation2 + $0x90] sm:$0xff]
        %v1021 = vld [vmem:[#allocation2 + $0x98] sm:$0xff]
        %v1022 = vld [vmem:[#allocation2 + $0xa8] sm:$0xff]
        %v1023 = vld [vmem:[#allocation2 + $0xb0] sm:$0xff]
        %v1024 = vld [vmem:[#allocation2 + $0xd8] sm:$0xff]
        %v1025 = vld [vmem:[#allocation2 + $0xe0] sm:$0xff]
        %v1026 = vld [vmem:[#allocation2 + $0xf0] sm:$0xff]
        %v1027 = vld [vmem:[#allocation2 + $0xf8] sm:$0xff]
        %v1028 = vld [vmem:[#allocation9] ss:$8 sm:$0x3]
        %v1030 = vperm.slane %v1028, 0
        %v1031 = vperm.slane %v1028, 1
        %v1034 = vmul.f32 %v1012, %v1030
        %v1035 = vmul.f32 %v1013, %v1031
        %v1036 = vmul.f32 %v1014, %v1030
        %v1037 = vmul.f32 %v1015, %v1031
        %v1038 = vmul.f32 %v1016, %v1030
        %v1039 = vmul.f32 %v1017, %v1031
        %v1040 = vmul.f32 %v1018, %v1030
        %v1041 = vmul.f32 %v1019, %v1031
        %v1042 = vmul.f32 %v1020, %v1030
        %v1043 = vmul.f32 %v1021, %v1031
        %v1044 = vmul.f32 %v1022, %v1030
        %v1045 = vmul.f32 %v1023, %v1031
        %v1046 = vmul.f32 %v1024, %v1030
        %v1047 = vmul.f32 %v1025, %v1031
        %v1048 = vmul.f32 %v1026, %v1030
        %v1049 = vmul.f32 %v1027, %v1031
        %v1050 = vadd.f32 %v1034, 0.0
        %v1051 = vadd.f32 %v1035, 0.0
        %v1052 = vadd.f32 %v1036, 0.0
        %v1053 = vadd.f32 %v1037, 0.0
        %v1054 = vadd.f32 %v1038, 0.0
        %v1055 = vadd.f32 %v1039, 0.0
        %v1056 = vadd.f32 %v1040, 0.0
        %v1057 = vadd.f32 %v1041, 0.0
        %v1058 = vadd.f32 %v1042, 0.0
        %v1059 = vadd.f32 %v1043, 0.0
        %v1060 = vadd.f32 %v1044, 0.0
        %v1061 = vadd.f32 %v1045, 0.0
        %v1062 = vadd.f32 %v1046, 0.0
        %v1063 = vadd.f32 %v1047, 0.0
        %v1064 = vadd.f32 %v1048, 0.0
        %v1065 = vadd.f32 %v1049, 0.0
        %v1066 = vld [vmem:[#allocation2 + $0x10] sm:$0xff]
        %v1067 = vld [vmem:[#allocation2 + $0x28] sm:$0xff]
        %v1068 = vld [vmem:[#allocation2 + $0x58] sm:$0xff]
        %v1069 = vld [vmem:[#allocation2 + $0x70] sm:$0xff]
        %v1070 = vld [vmem:[#allocation2 + $0xa0] sm:$0xff]
        %v1071 = vld [vmem:[#allocation2 + $0xb8] sm:$0xff]
        %v1072 = vld [vmem:[#allocation2 + $0xe8] sm:$0xff]
        %v1073 = vld [vmem:[#allocation2 + $0x100] sm:$0xff]
        %s1074 = scalar_lea.vmem [#allocation9], 1
        %v1075 = vld [vmem:[%s1074] ss:$8 sm:$0x3]
        %v1077 = vperm.slane %v1075, 0
        %v1078 = vperm.slane %v1075, 1
        %1079 = vrot.lane.b32.xlu0 %v1077, 16
        %v1080 = vpop.permute.xlu0 %1079
        %1081 = vrot.lane.b32.xlu0 %v1078, 16
        %v1082 = vpop.permute.xlu0 %1081
        %v1083 = vsel %vm732, %v1080, %v1082
        %v1087 = vmul.f32 %v1012, %v1080
        %v1088 = vmul.f32 %v1013, %v1083
        %v1089 = vmul.f32 %v1066, %v1082
        %v1090 = vmul.f32 %v1014, %v1080
        %v1091 = vmul.f32 %v1015, %v1083
        %v1092 = vmul.f32 %v1067, %v1082
        %v1093 = vmul.f32 %v1016, %v1080
        %v1094 = vmul.f32 %v1017, %v1083
        %v1095 = vmul.f32 %v1068, %v1082
        %v1096 = vmul.f32 %v1018, %v1080
        %v1097 = vmul.f32 %v1019, %v1083
        %v1098 = vmul.f32 %v1069, %v1082
        %v1099 = vmul.f32 %v1020, %v1080
        %v1100 = vmul.f32 %v1021, %v1083
        %v1101 = vmul.f32 %v1070, %v1082
        %v1102 = vmul.f32 %v1022, %v1080
        %v1103 = vmul.f32 %v1023, %v1083
        %v1104 = vmul.f32 %v1071, %v1082
        %v1105 = vmul.f32 %v1024, %v1080
        %v1106 = vmul.f32 %v1025, %v1083
        %v1107 = vmul.f32 %v1072, %v1082
        %v1108 = vmul.f32 %v1026, %v1080
        %v1109 = vmul.f32 %v1027, %v1083
        %v1110 = vmul.f32 %v1073, %v1082
        %1135 = vrot.lane.b32.xlu0 %v1087, 112
        %v1136 = vpop.permute.xlu0 %1135
        %1137 = vrot.lane.b32.xlu0 %v1088, 112
        %v1138 = vpop.permute.xlu0 %1137
        %1139 = vrot.lane.b32.xlu0 %v1089, 112
        %v1140 = vpop.permute.xlu0 %1139
        %1141 = vrot.lane.b32.xlu0 %v1090, 112
        %v1142 = vpop.permute.xlu0 %1141
        %1143 = vrot.lane.b32.xlu0 %v1091, 112
        %v1144 = vpop.permute.xlu0 %1143
        %1145 = vrot.lane.b32.xlu0 %v1092, 112
        %v1146 = vpop.permute.xlu0 %1145
        %1147 = vrot.lane.b32.xlu0 %v1093, 112
        %v1148 = vpop.permute.xlu0 %1147
        %1149 = vrot.lane.b32.xlu0 %v1094, 112
        %v1150 = vpop.permute.xlu0 %1149
        %1151 = vrot.lane.b32.xlu0 %v1095, 112
        %v1152 = vpop.permute.xlu0 %1151
        %1153 = vrot.lane.b32.xlu0 %v1096, 112
        %v1154 = vpop.permute.xlu0 %1153
        %1155 = vrot.lane.b32.xlu0 %v1097, 112
        %v1156 = vpop.permute.xlu0 %1155
        %1157 = vrot.lane.b32.xlu0 %v1098, 112
        %v1158 = vpop.permute.xlu0 %1157
        %1159 = vrot.lane.b32.xlu0 %v1099, 112
        %v1160 = vpop.permute.xlu0 %1159
        %1161 = vrot.lane.b32.xlu0 %v1100, 112
        %v1162 = vpop.permute.xlu0 %1161
        %1163 = vrot.lane.b32.xlu0 %v1101, 112
        %v1164 = vpop.permute.xlu0 %1163
        %1165 = vrot.lane.b32.xlu0 %v1102, 112
        %v1166 = vpop.permute.xlu0 %1165
        %1167 = vrot.lane.b32.xlu0 %v1103, 112
        %v1168 = vpop.permute.xlu0 %1167
        %1169 = vrot.lane.b32.xlu0 %v1104, 112
        %v1170 = vpop.permute.xlu0 %1169
        %1171 = vrot.lane.b32.xlu0 %v1105, 112
        %v1172 = vpop.permute.xlu0 %1171
        %1173 = vrot.lane.b32.xlu0 %v1106, 112
        %v1174 = vpop.permute.xlu0 %1173
        %1175 = vrot.lane.b32.xlu0 %v1107, 112
        %v1176 = vpop.permute.xlu0 %1175
        %1177 = vrot.lane.b32.xlu0 %v1108, 112
        %v1178 = vpop.permute.xlu0 %1177
        %1179 = vrot.lane.b32.xlu0 %v1109, 112
        %v1180 = vpop.permute.xlu0 %1179
        %1181 = vrot.lane.b32.xlu0 %v1110, 112
        %v1182 = vpop.permute.xlu0 %1181
        %vm1183 = vcmask 916480
        %v1184 = vsel %vm1183, %v1136, %v1138
        %v1185 = vsel %vm1183, %v1138, %v1140
        %v1186 = vsel %vm1183, %v1142, %v1144
        %v1187 = vsel %vm1183, %v1144, %v1146
        %v1188 = vsel %vm1183, %v1148, %v1150
        %v1189 = vsel %vm1183, %v1150, %v1152
        %v1190 = vsel %vm1183, %v1154, %v1156
        %v1191 = vsel %vm1183, %v1156, %v1158
        %v1192 = vsel %vm1183, %v1160, %v1162
        %v1193 = vsel %vm1183, %v1162, %v1164
        %v1194 = vsel %vm1183, %v1166, %v1168
        %v1195 = vsel %vm1183, %v1168, %v1170
        %v1196 = vsel %vm1183, %v1172, %v1174
        %v1197 = vsel %vm1183, %v1174, %v1176
        %v1198 = vsel %vm1183, %v1178, %v1180
        %v1199 = vsel %vm1183, %v1180, %v1182
        %v1216 = vadd.f32 %v1050, %v1184
        %v1217 = vadd.f32 %v1051, %v1185
        %v1218 = vadd.f32 %v1052, %v1186
        %v1219 = vadd.f32 %v1053, %v1187
        %v1220 = vadd.f32 %v1054, %v1188
        %v1221 = vadd.f32 %v1055, %v1189
        %v1222 = vadd.f32 %v1056, %v1190
        %v1223 = vadd.f32 %v1057, %v1191
        %v1224 = vadd.f32 %v1058, %v1192
        %v1225 = vadd.f32 %v1059, %v1193
        %v1226 = vadd.f32 %v1060, %v1194
        %v1227 = vadd.f32 %v1061, %v1195
        %v1228 = vadd.f32 %v1062, %v1196
        %v1229 = vadd.f32 %v1063, %v1197
        %v1230 = vadd.f32 %v1064, %v1198
        %v1231 = vadd.f32 %v1065, %v1199
        %s1232 = scalar_lea.vmem [#allocation9], 2
        %v1233 = vld [vmem:[%s1232] ss:$8 sm:$0x3]
        %v1235 = vperm.slane %v1233, 0
        %v1236 = vperm.slane %v1233, 1
        %1237 = vrot.lane.b32.xlu0 %v1235, 32
        %v1238 = vpop.permute.xlu0 %1237
        %1239 = vrot.lane.b32.xlu0 %v1236, 32
        %v1240 = vpop.permute.xlu0 %1239
        %vm1241 = vcmask 261120
        %v1242 = vsel %vm1241, %v1238, %v1240
        %v1246 = vmul.f32 %v1012, %v1238
        %v1247 = vmul.f32 %v1013, %v1242
        %v1248 = vmul.f32 %v1066, %v1240
        %v1249 = vmul.f32 %v1014, %v1238
        %v1250 = vmul.f32 %v1015, %v1242
        %v1251 = vmul.f32 %v1067, %v1240
        %v1252 = vmul.f32 %v1016, %v1238
        %v1253 = vmul.f32 %v1017, %v1242
        %v1254 = vmul.f32 %v1068, %v1240
        %v1255 = vmul.f32 %v1018, %v1238
        %v1256 = vmul.f32 %v1019, %v1242
        %v1257 = vmul.f32 %v1069, %v1240
        %v1258 = vmul.f32 %v1020, %v1238
        %v1259 = vmul.f32 %v1021, %v1242
        %v1260 = vmul.f32 %v1070, %v1240
        %v1261 = vmul.f32 %v1022, %v1238
        %v1262 = vmul.f32 %v1023, %v1242
        %v1263 = vmul.f32 %v1071, %v1240
        %v1264 = vmul.f32 %v1024, %v1238
        %v1265 = vmul.f32 %v1025, %v1242
        %v1266 = vmul.f32 %v1072, %v1240
        %v1267 = vmul.f32 %v1026, %v1238
        %v1268 = vmul.f32 %v1027, %v1242
        %v1269 = vmul.f32 %v1073, %v1240
        %1294 = vrot.lane.b32.xlu0 %v1246, 96
        %v1295 = vpop.permute.xlu0 %1294
        %1296 = vrot.lane.b32.xlu0 %v1247, 96
        %v1297 = vpop.permute.xlu0 %1296
        %1298 = vrot.lane.b32.xlu0 %v1248, 96
        %v1299 = vpop.permute.xlu0 %1298
        %1300 = vrot.lane.b32.xlu0 %v1249, 96
        %v1301 = vpop.permute.xlu0 %1300
        %1302 = vrot.lane.b32.xlu0 %v1250, 96
        %v1303 = vpop.permute.xlu0 %1302
        %1304 = vrot.lane.b32.xlu0 %v1251, 96
        %v1305 = vpop.permute.xlu0 %1304
        %1306 = vrot.lane.b32.xlu0 %v1252, 96
        %v1307 = vpop.permute.xlu0 %1306
        %1308 = vrot.lane.b32.xlu0 %v1253, 96
        %v1309 = vpop.permute.xlu0 %1308
        %1310 = vrot.lane.b32.xlu0 %v1254, 96
        %v1311 = vpop.permute.xlu0 %1310
        %1312 = vrot.lane.b32.xlu0 %v1255, 96
        %v1313 = vpop.permute.xlu0 %1312
        %1314 = vrot.lane.b32.xlu0 %v1256, 96
        %v1315 = vpop.permute.xlu0 %1314
        %1316 = vrot.lane.b32.xlu0 %v1257, 96
        %v1317 = vpop.permute.xlu0 %1316
        %1318 = vrot.lane.b32.xlu0 %v1258, 96
        %v1319 = vpop.permute.xlu0 %1318
        %1320 = vrot.lane.b32.xlu0 %v1259, 96
        %v1321 = vpop.permute.xlu0 %1320
        %1322 = vrot.lane.b32.xlu0 %v1260, 96
        %v1323 = vpop.permute.xlu0 %1322
        %1324 = vrot.lane.b32.xlu0 %v1261, 96
        %v1325 = vpop.permute.xlu0 %1324
        %1326 = vrot.lane.b32.xlu0 %v1262, 96
        %v1327 = vpop.permute.xlu0 %1326
        %1328 = vrot.lane.b32.xlu0 %v1263, 96
        %v1329 = vpop.permute.xlu0 %1328
        %1330 = vrot.lane.b32.xlu0 %v1264, 96
        %v1331 = vpop.permute.xlu0 %1330
        %1332 = vrot.lane.b32.xlu0 %v1265, 96
        %v1333 = vpop.permute.xlu0 %1332
        %1334 = vrot.lane.b32.xlu0 %v1266, 96
        %v1335 = vpop.permute.xlu0 %1334
        %1336 = vrot.lane.b32.xlu0 %v1267, 96
        %v1337 = vpop.permute.xlu0 %1336
        %1338 = vrot.lane.b32.xlu0 %v1268, 96
        %v1339 = vpop.permute.xlu0 %1338
        %1340 = vrot.lane.b32.xlu0 %v1269, 96
        %v1341 = vpop.permute.xlu0 %1340
        %vm1342 = vcmask 785408
        %v1343 = vsel %vm1342, %v1295, %v1297
        %v1344 = vsel %vm1342, %v1297, %v1299
        %v1345 = vsel %vm1342, %v1301, %v1303
        %v1346 = vsel %vm1342, %v1303, %v1305
        %v1347 = vsel %vm1342, %v1307, %v1309
        %v1348 = vsel %vm1342, %v1309, %v1311
        %v1349 = vsel %vm1342, %v1313, %v1315
        %v1350 = vsel %vm1342, %v1315, %v1317
        %v1351 = vsel %vm1342, %v1319, %v1321
        %v1352 = vsel %vm1342, %v1321, %v1323
        %v1353 = vsel %vm1342, %v1325, %v1327
        %v1354 = vsel %vm1342, %v1327, %v1329
        %v1355 = vsel %vm1342, %v1331, %v1333
        %v1356 = vsel %vm1342, %v1333, %v1335
        %v1357 = vsel %vm1342, %v1337, %v1339
        %v1358 = vsel %vm1342, %v1339, %v1341
        %v1375 = vadd.f32 %v1216, %v1343
        %v1376 = vadd.f32 %v1217, %v1344
        %v1377 = vadd.f32 %v1218, %v1345
        %v1378 = vadd.f32 %v1219, %v1346
        %v1379 = vadd.f32 %v1220, %v1347
        %v1380 = vadd.f32 %v1221, %v1348
        %v1381 = vadd.f32 %v1222, %v1349
        %v1382 = vadd.f32 %v1223, %v1350
        %v1383 = vadd.f32 %v1224, %v1351
        %v1384 = vadd.f32 %v1225, %v1352
        %v1385 = vadd.f32 %v1226, %v1353
        %v1386 = vadd.f32 %v1227, %v1354
        %v1387 = vadd.f32 %v1228, %v1355
        %v1388 = vadd.f32 %v1229, %v1356
        %v1389 = vadd.f32 %v1230, %v1357
        %v1390 = vadd.f32 %v1231, %v1358
        %v1391 = vld [vmem:[#allocation2] sm:$0xfe]
        %v1392 = vld [vmem:[#allocation2 + $0x8] sm:$0xfe]
        %v1393 = vld [vmem:[#allocation2 + $0x30] sm:$0x1]
        %v1394 = vld [vmem:[#allocation2 + $0x38] sm:$0x1]
        %v1395 = vld [vmem:[#allocation2 + $0x48] sm:$0xfe]
        %v1396 = vld [vmem:[#allocation2 + $0x50] sm:$0xfe]
        %v1397 = vld [vmem:[#allocation2 + $0x78] sm:$0x1]
        %v1398 = vld [vmem:[#allocation2 + $0x80] sm:$0x1]
        %v1399 = vld [vmem:[#allocation2 + $0x90] sm:$0xfe]
        %v1400 = vld [vmem:[#allocation2 + $0x98] sm:$0xfe]
        %v1401 = vld [vmem:[#allocation2 + $0xc0] sm:$0x1]
        %v1402 = vld [vmem:[#allocation2 + $0xc8] sm:$0x1]
        %v1403 = vld [vmem:[#allocation2 + $0xd8] sm:$0xfe]
        %v1404 = vld [vmem:[#allocation2 + $0xe0] sm:$0xfe]
        %v1405 = vld [vmem:[#allocation2 + $0x108] sm:$0x1]
        %v1406 = vld [vmem:[#allocation2 + $0x110] sm:$0x1]
        %vm1431 = vcmask 1046528
        %v1432 = vrot.slane %v1391, 1
        %v1433 = vrot.slane %v1014, 1
        %v1434 = vsel %vm1431, %v1432, %v1433
        %v1435 = vrot.slane %v1392, 1
        %v1436 = vrot.slane %v1015, 1
        %v1437 = vsel %vm1431, %v1435, %v1436
        %v1438 = vrot.slane %v1393, 1
        %v1439 = vsel %vm1431, %v1433, %v1438
        %v1440 = vrot.slane %v1394, 1
        %v1441 = vsel %vm1431, %v1436, %v1440
        %v1442 = vrot.slane %v1395, 1
        %v1443 = vrot.slane %v1018, 1
        %v1444 = vsel %vm1431, %v1442, %v1443
        %v1445 = vrot.slane %v1396, 1
        %v1446 = vrot.slane %v1019, 1
        %v1447 = vsel %vm1431, %v1445, %v1446
        %v1448 = vrot.slane %v1397, 1
        %v1449 = vsel %vm1431, %v1443, %v1448
        %v1450 = vrot.slane %v1398, 1
        %v1451 = vsel %vm1431, %v1446, %v1450
        %v1452 = vrot.slane %v1399, 1
        %v1453 = vrot.slane %v1022, 1
        %v1454 = vsel %vm1431, %v1452, %v1453
        %v1455 = vrot.slane %v1400, 1
        %v1456 = vrot.slane %v1023, 1
        %v1457 = vsel %vm1431, %v1455, %v1456
        %v1458 = vrot.slane %v1401, 1
        %v1459 = vsel %vm1431, %v1453, %v1458
        %v1460 = vrot.slane %v1402, 1
        %v1461 = vsel %vm1431, %v1456, %v1460
        %v1462 = vrot.slane %v1403, 1
        %v1463 = vrot.slane %v1026, 1
        %v1464 = vsel %vm1431, %v1462, %v1463
        %v1465 = vrot.slane %v1404, 1
        %v1466 = vrot.slane %v1027, 1
        %v1467 = vsel %vm1431, %v1465, %v1466
        %v1468 = vrot.slane %v1405, 1
        %v1469 = vsel %vm1431, %v1463, %v1468
        %v1470 = vrot.slane %v1406, 1
        %v1471 = vsel %vm1431, %v1466, %v1470
        %s1488 = scalar_lea.vmem [#allocation9], 3
        %v1489 = vld [vmem:[%s1488] ss:$8 sm:$0x3]
        %v1491 = vperm.slane %v1489, 0
        %v1492 = vperm.slane %v1489, 1
        %v1495 = vmul.f32 %v1434, %v1491
        %v1496 = vmul.f32 %v1437, %v1492
        %v1497 = vmul.f32 %v1439, %v1491
        %v1498 = vmul.f32 %v1441, %v1492
        %v1499 = vmul.f32 %v1444, %v1491
        %v1500 = vmul.f32 %v1447, %v1492
        %v1501 = vmul.f32 %v1449, %v1491
        %v1502 = vmul.f32 %v1451, %v1492
        %v1503 = vmul.f32 %v1454, %v1491
        %v1504 = vmul.f32 %v1457, %v1492
        %v1505 = vmul.f32 %v1459, %v1491
        %v1506 = vmul.f32 %v1461, %v1492
        %v1507 = vmul.f32 %v1464, %v1491
        %v1508 = vmul.f32 %v1467, %v1492
        %v1509 = vmul.f32 %v1469, %v1491
        %v1510 = vmul.f32 %v1471, %v1492
        %v1511 = vadd.f32 %v1375, %v1495
        %v1512 = vadd.f32 %v1376, %v1496
        %v1513 = vadd.f32 %v1377, %v1497
        %v1514 = vadd.f32 %v1378, %v1498
        %v1515 = vadd.f32 %v1379, %v1499
        %v1516 = vadd.f32 %v1380, %v1500
        %v1517 = vadd.f32 %v1381, %v1501
        %v1518 = vadd.f32 %v1382, %v1502
        %v1519 = vadd.f32 %v1383, %v1503
        %v1520 = vadd.f32 %v1384, %v1504
        %v1521 = vadd.f32 %v1385, %v1505
        %v1522 = vadd.f32 %v1386, %v1506
        %v1523 = vadd.f32 %v1387, %v1507
        %v1524 = vadd.f32 %v1388, %v1508
        %v1525 = vadd.f32 %v1389, %v1509
        %v1526 = vadd.f32 %v1390, %v1510
        %v1527 = vld [vmem:[#allocation2 + $0x10] sm:$0xfe]
        %v1528 = vld [vmem:[#allocation2 + $0x40] sm:$0x1]
        %v1529 = vld [vmem:[#allocation2 + $0x58] sm:$0xfe]
        %v1530 = vld [vmem:[#allocation2 + $0x88] sm:$0x1]
        %v1531 = vld [vmem:[#allocation2 + $0xa0] sm:$0xfe]
        %v1532 = vld [vmem:[#allocation2 + $0xd0] sm:$0x1]
        %v1533 = vld [vmem:[#allocation2 + $0xe8] sm:$0xfe]
        %v1534 = vld [vmem:[#allocation2 + $0x118] sm:$0x1]
        %v1547 = vrot.slane %v1527, 1
        %v1548 = vrot.slane %v1067, 1
        %v1549 = vsel %vm1431, %v1547, %v1548
        %v1550 = vrot.slane %v1528, 1
        %v1551 = vsel %vm1431, %v1548, %v1550
        %v1552 = vrot.slane %v1529, 1
        %v1553 = vrot.slane %v1069, 1
        %v1554 = vsel %vm1431, %v1552, %v1553
        %v1555 = vrot.slane %v1530, 1
        %v1556 = vsel %vm1431, %v1553, %v1555
        %v1557 = vrot.slane %v1531, 1
        %v1558 = vrot.slane %v1071, 1
        %v1559 = vsel %vm1431, %v1557, %v1558
        %v1560 = vrot.slane %v1532, 1
        %v1561 = vsel %vm1431, %v1558, %v1560
        %v1562 = vrot.slane %v1533, 1
        %v1563 = vrot.slane %v1073, 1
        %v1564 = vsel %vm1431, %v1562, %v1563
        %v1565 = vrot.slane %v1534, 1
        %v1566 = vsel %vm1431, %v1563, %v1565
        %s1575 = scalar_lea.vmem [#allocation9], 4
        %v1576 = vld [vmem:[%s1575] ss:$8 sm:$0x3]
        %v1578 = vperm.slane %v1576, 0
        %v1579 = vperm.slane %v1576, 1
        %1580 = vrot.lane.b32.xlu0 %v1578, 16
        %v1581 = vpop.permute.xlu0 %1580
        %1582 = vrot.lane.b32.xlu0 %v1579, 16
        %v1583 = vpop.permute.xlu0 %1582
        %v1584 = vsel %vm732, %v1581, %v1583
        %v1588 = vmul.f32 %v1434, %v1581
        %v1589 = vmul.f32 %v1437, %v1584
        %v1590 = vmul.f32 %v1549, %v1583
        %v1591 = vmul.f32 %v1439, %v1581
        %v1592 = vmul.f32 %v1441, %v1584
        %v1593 = vmul.f32 %v1551, %v1583
        %v1594 = vmul.f32 %v1444, %v1581
        %v1595 = vmul.f32 %v1447, %v1584
        %v1596 = vmul.f32 %v1554, %v1583
        %v1597 = vmul.f32 %v1449, %v1581
        %v1598 = vmul.f32 %v1451, %v1584
        %v1599 = vmul.f32 %v1556, %v1583
        %v1600 = vmul.f32 %v1454, %v1581
        %v1601 = vmul.f32 %v1457, %v1584
        %v1602 = vmul.f32 %v1559, %v1583
        %v1603 = vmul.f32 %v1459, %v1581
        %v1604 = vmul.f32 %v1461, %v1584
        %v1605 = vmul.f32 %v1561, %v1583
        %v1606 = vmul.f32 %v1464, %v1581
        %v1607 = vmul.f32 %v1467, %v1584
        %v1608 = vmul.f32 %v1564, %v1583
        %v1609 = vmul.f32 %v1469, %v1581
        %v1610 = vmul.f32 %v1471, %v1584
        %v1611 = vmul.f32 %v1566, %v1583
        %1636 = vrot.lane.b32.xlu0 %v1588, 112
        %v1637 = vpop.permute.xlu0 %1636
        %1638 = vrot.lane.b32.xlu0 %v1589, 112
        %v1639 = vpop.permute.xlu0 %1638
        %1640 = vrot.lane.b32.xlu0 %v1590, 112
        %v1641 = vpop.permute.xlu0 %1640
        %1642 = vrot.lane.b32.xlu0 %v1591, 112
        %v1643 = vpop.permute.xlu0 %1642
        %1644 = vrot.lane.b32.xlu0 %v1592, 112
        %v1645 = vpop.permute.xlu0 %1644
        %1646 = vrot.lane.b32.xlu0 %v1593, 112
        %v1647 = vpop.permute.xlu0 %1646
        %1648 = vrot.lane.b32.xlu0 %v1594, 112
        %v1649 = vpop.permute.xlu0 %1648
        %1650 = vrot.lane.b32.xlu0 %v1595, 112
        %v1651 = vpop.permute.xlu0 %1650
        %1652 = vrot.lane.b32.xlu0 %v1596, 112
        %v1653 = vpop.permute.xlu0 %1652
        %1654 = vrot.lane.b32.xlu0 %v1597, 112
        %v1655 = vpop.permute.xlu0 %1654
        %1656 = vrot.lane.b32.xlu0 %v1598, 112
        %v1657 = vpop.permute.xlu0 %1656
        %1658 = vrot.lane.b32.xlu0 %v1599, 112
        %v1659 = vpop.permute.xlu0 %1658
        %1660 = vrot.lane.b32.xlu0 %v1600, 112
        %v1661 = vpop.permute.xlu0 %1660
        %1662 = vrot.lane.b32.xlu0 %v1601, 112
        %v1663 = vpop.permute.xlu0 %1662
        %1664 = vrot.lane.b32.xlu0 %v1602, 112
        %v1665 = vpop.permute.xlu0 %1664
        %1666 = vrot.lane.b32.xlu0 %v1603, 112
        %v1667 = vpop.permute.xlu0 %1666
        %1668 = vrot.lane.b32.xlu0 %v1604, 112
        %v1669 = vpop.permute.xlu0 %1668
        %1670 = vrot.lane.b32.xlu0 %v1605, 112
        %v1671 = vpop.permute.xlu0 %1670
        %1672 = vrot.lane.b32.xlu0 %v1606, 112
        %v1673 = vpop.permute.xlu0 %1672
        %1674 = vrot.lane.b32.xlu0 %v1607, 112
        %v1675 = vpop.permute.xlu0 %1674
        %1676 = vrot.lane.b32.xlu0 %v1608, 112
        %v1677 = vpop.permute.xlu0 %1676
        %1678 = vrot.lane.b32.xlu0 %v1609, 112
        %v1679 = vpop.permute.xlu0 %1678
        %1680 = vrot.lane.b32.xlu0 %v1610, 112
        %v1681 = vpop.permute.xlu0 %1680
        %1682 = vrot.lane.b32.xlu0 %v1611, 112
        %v1683 = vpop.permute.xlu0 %1682
        %v1684 = vsel %vm1183, %v1637, %v1639
        %v1685 = vsel %vm1183, %v1639, %v1641
        %v1686 = vsel %vm1183, %v1643, %v1645
        %v1687 = vsel %vm1183, %v1645, %v1647
        %v1688 = vsel %vm1183, %v1649, %v1651
        %v1689 = vsel %vm1183, %v1651, %v1653
        %v1690 = vsel %vm1183, %v1655, %v1657
        %v1691 = vsel %vm1183, %v1657, %v1659
        %v1692 = vsel %vm1183, %v1661, %v1663
        %v1693 = vsel %vm1183, %v1663, %v1665
        %v1694 = vsel %vm1183, %v1667, %v1669
        %v1695 = vsel %vm1183, %v1669, %v1671
        %v1696 = vsel %vm1183, %v1673, %v1675
        %v1697 = vsel %vm1183, %v1675, %v1677
        %v1698 = vsel %vm1183, %v1679, %v1681
        %v1699 = vsel %vm1183, %v1681, %v1683
        %v1716 = vadd.f32 %v1511, %v1684
        %v1717 = vadd.f32 %v1512, %v1685
        %v1718 = vadd.f32 %v1513, %v1686
        %v1719 = vadd.f32 %v1514, %v1687
        %v1720 = vadd.f32 %v1515, %v1688
        %v1721 = vadd.f32 %v1516, %v1689
        %v1722 = vadd.f32 %v1517, %v1690
        %v1723 = vadd.f32 %v1518, %v1691
        %v1724 = vadd.f32 %v1519, %v1692
        %v1725 = vadd.f32 %v1520, %v1693
        %v1726 = vadd.f32 %v1521, %v1694
        %v1727 = vadd.f32 %v1522, %v1695
        %v1728 = vadd.f32 %v1523, %v1696
        %v1729 = vadd.f32 %v1524, %v1697
        %v1730 = vadd.f32 %v1525, %v1698
        %v1731 = vadd.f32 %v1526, %v1699
        %s1732 = scalar_lea.vmem [#allocation9], 5
        %v1733 = vld [vmem:[%s1732] ss:$8 sm:$0x3]
        %v1735 = vperm.slane %v1733, 0
        %v1736 = vperm.slane %v1733, 1
        %1737 = vrot.lane.b32.xlu0 %v1735, 32
        %v1738 = vpop.permute.xlu0 %1737
        %1739 = vrot.lane.b32.xlu0 %v1736, 32
        %v1740 = vpop.permute.xlu0 %1739
        %v1741 = vsel %vm1241, %v1738, %v1740
        %v1745 = vmul.f32 %v1434, %v1738
        %v1746 = vmul.f32 %v1437, %v1741
        %v1747 = vmul.f32 %v1549, %v1740
        %v1748 = vmul.f32 %v1439, %v1738
        %v1749 = vmul.f32 %v1441, %v1741
        %v1750 = vmul.f32 %v1551, %v1740
        %v1751 = vmul.f32 %v1444, %v1738
        %v1752 = vmul.f32 %v1447, %v1741
        %v1753 = vmul.f32 %v1554, %v1740
        %v1754 = vmul.f32 %v1449, %v1738
        %v1755 = vmul.f32 %v1451, %v1741
        %v1756 = vmul.f32 %v1556, %v1740
        %v1757 = vmul.f32 %v1454, %v1738
        %v1758 = vmul.f32 %v1457, %v1741
        %v1759 = vmul.f32 %v1559, %v1740
        %v1760 = vmul.f32 %v1459, %v1738
        %v1761 = vmul.f32 %v1461, %v1741
        %v1762 = vmul.f32 %v1561, %v1740
        %v1763 = vmul.f32 %v1464, %v1738
        %v1764 = vmul.f32 %v1467, %v1741
        %v1765 = vmul.f32 %v1564, %v1740
        %v1766 = vmul.f32 %v1469, %v1738
        %v1767 = vmul.f32 %v1471, %v1741
        %v1768 = vmul.f32 %v1566, %v1740
        %1793 = vrot.lane.b32.xlu0 %v1745, 96
        %v1794 = vpop.permute.xlu0 %1793
        %1795 = vrot.lane.b32.xlu0 %v1746, 96
        %v1796 = vpop.permute.xlu0 %1795
        %1797 = vrot.lane.b32.xlu0 %v1747, 96
        %v1798 = vpop.permute.xlu0 %1797
        %1799 = vrot.lane.b32.xlu0 %v1748, 96
        %v1800 = vpop.permute.xlu0 %1799
        %1801 = vrot.lane.b32.xlu0 %v1749, 96
        %v1802 = vpop.permute.xlu0 %1801
        %1803 = vrot.lane.b32.xlu0 %v1750, 96
        %v1804 = vpop.permute.xlu0 %1803
        %1805 = vrot.lane.b32.xlu0 %v1751, 96
        %v1806 = vpop.permute.xlu0 %1805
        %1807 = vrot.lane.b32.xlu0 %v1752, 96
        %v1808 = vpop.permute.xlu0 %1807
        %1809 = vrot.lane.b32.xlu0 %v1753, 96
        %v1810 = vpop.permute.xlu0 %1809
        %1811 = vrot.lane.b32.xlu0 %v1754, 96
        %v1812 = vpop.permute.xlu0 %1811
        %1813 = vrot.lane.b32.xlu0 %v1755, 96
        %v1814 = vpop.permute.xlu0 %1813
        %1815 = vrot.lane.b32.xlu0 %v1756, 96
        %v1816 = vpop.permute.xlu0 %1815
        %1817 = vrot.lane.b32.xlu0 %v1757, 96
        %v1818 = vpop.permute.xlu0 %1817
        %1819 = vrot.lane.b32.xlu0 %v1758, 96
        %v1820 = vpop.permute.xlu0 %1819
        %1821 = vrot.lane.b32.xlu0 %v1759, 96
        %v1822 = vpop.permute.xlu0 %1821
        %1823 = vrot.lane.b32.xlu0 %v1760, 96
        %v1824 = vpop.permute.xlu0 %1823
        %1825 = vrot.lane.b32.xlu0 %v1761, 96
        %v1826 = vpop.permute.xlu0 %1825
        %1827 = vrot.lane.b32.xlu0 %v1762, 96
        %v1828 = vpop.permute.xlu0 %1827
        %1829 = vrot.lane.b32.xlu0 %v1763, 96
        %v1830 = vpop.permute.xlu0 %1829
        %1831 = vrot.lane.b32.xlu0 %v1764, 96
        %v1832 = vpop.permute.xlu0 %1831
        %1833 = vrot.lane.b32.xlu0 %v1765, 96
        %v1834 = vpop.permute.xlu0 %1833
        %1835 = vrot.lane.b32.xlu0 %v1766, 96
        %v1836 = vpop.permute.xlu0 %1835
        %1837 = vrot.lane.b32.xlu0 %v1767, 96
        %v1838 = vpop.permute.xlu0 %1837
        %1839 = vrot.lane.b32.xlu0 %v1768, 96
        %v1840 = vpop.permute.xlu0 %1839
        %v1841 = vsel %vm1342, %v1794, %v1796
        %v1842 = vsel %vm1342, %v1796, %v1798
        %v1843 = vsel %vm1342, %v1800, %v1802
        %v1844 = vsel %vm1342, %v1802, %v1804
        %v1845 = vsel %vm1342, %v1806, %v1808
        %v1846 = vsel %vm1342, %v1808, %v1810
        %v1847 = vsel %vm1342, %v1812, %v1814
        %v1848 = vsel %vm1342, %v1814, %v1816
        %v1849 = vsel %vm1342, %v1818, %v1820
        %v1850 = vsel %vm1342, %v1820, %v1822
        %v1851 = vsel %vm1342, %v1824, %v1826
        %v1852 = vsel %vm1342, %v1826, %v1828
        %v1853 = vsel %vm1342, %v1830, %v1832
        %v1854 = vsel %vm1342, %v1832, %v1834
        %v1855 = vsel %vm1342, %v1836, %v1838
        %v1856 = vsel %vm1342, %v1838, %v1840
        %v1873 = vadd.f32 %v1716, %v1841
        %v1874 = vadd.f32 %v1717, %v1842
        %v1875 = vadd.f32 %v1718, %v1843
        %v1876 = vadd.f32 %v1719, %v1844
        %v1877 = vadd.f32 %v1720, %v1845
        %v1878 = vadd.f32 %v1721, %v1846
        %v1879 = vadd.f32 %v1722, %v1847
        %v1880 = vadd.f32 %v1723, %v1848
        %v1881 = vadd.f32 %v1724, %v1849
        %v1882 = vadd.f32 %v1725, %v1850
        %v1883 = vadd.f32 %v1726, %v1851
        %v1884 = vadd.f32 %v1727, %v1852
        %v1885 = vadd.f32 %v1728, %v1853
        %v1886 = vadd.f32 %v1729, %v1854
        %v1887 = vadd.f32 %v1730, %v1855
        %v1888 = vadd.f32 %v1731, %v1856
        %v1889 = vld [vmem:[#allocation2] sm:$0xfc]
        %v1890 = vld [vmem:[#allocation2 + $0x8] sm:$0xfc]
        %v1891 = vld [vmem:[#allocation2 + $0x30] sm:$0x3]
        %v1892 = vld [vmem:[#allocation2 + $0x38] sm:$0x3]
        %v1893 = vld [vmem:[#allocation2 + $0x48] sm:$0xfc]
        %v1894 = vld [vmem:[#allocation2 + $0x50] sm:$0xfc]
        %v1895 = vld [vmem:[#allocation2 + $0x78] sm:$0x3]
        %v1896 = vld [vmem:[#allocation2 + $0x80] sm:$0x3]
        %v1897 = vld [vmem:[#allocation2 + $0x90] sm:$0xfc]
        %v1898 = vld [vmem:[#allocation2 + $0x98] sm:$0xfc]
        %v1899 = vld [vmem:[#allocation2 + $0xc0] sm:$0x3]
        %v1900 = vld [vmem:[#allocation2 + $0xc8] sm:$0x3]
        %v1901 = vld [vmem:[#allocation2 + $0xd8] sm:$0xfc]
        %v1902 = vld [vmem:[#allocation2 + $0xe0] sm:$0xfc]
        %v1903 = vld [vmem:[#allocation2 + $0x108] sm:$0x3]
        %v1904 = vld [vmem:[#allocation2 + $0x110] sm:$0x3]
        %vm1921 = vcmask 1045504
        %v1922 = vrot.slane %v1889, 2
        %v1923 = vrot.slane %v1014, 2
        %v1924 = vsel %vm1921, %v1922, %v1923
        %v1925 = vrot.slane %v1890, 2
        %v1926 = vrot.slane %v1015, 2
        %v1927 = vsel %vm1921, %v1925, %v1926
        %v1928 = vrot.slane %v1891, 2
        %v1929 = vsel %vm1921, %v1923, %v1928
        %v1930 = vrot.slane %v1892, 2
        %v1931 = vsel %vm1921, %v1926, %v1930
        %v1932 = vrot.slane %v1893, 2
        %v1933 = vrot.slane %v1018, 2
        %v1934 = vsel %vm1921, %v1932, %v1933
        %v1935 = vrot.slane %v1894, 2
        %v1936 = vrot.slane %v1019, 2
        %v1937 = vsel %vm1921, %v1935, %v1936
        %v1938 = vrot.slane %v1895, 2
        %v1939 = vsel %vm1921, %v1933, %v1938
        %v1940 = vrot.slane %v1896, 2
        %v1941 = vsel %vm1921, %v1936, %v1940
        %v1942 = vrot.slane %v1897, 2
        %v1943 = vrot.slane %v1022, 2
        %v1944 = vsel %vm1921, %v1942, %v1943
        %v1945 = vrot.slane %v1898, 2
        %v1946 = vrot.slane %v1023, 2
        %v1947 = vsel %vm1921, %v1945, %v1946
        %v1948 = vrot.slane %v1899, 2
        %v1949 = vsel %vm1921, %v1943, %v1948
        %v1950 = vrot.slane %v1900, 2
        %v1951 = vsel %vm1921, %v1946, %v1950
        %v1952 = vrot.slane %v1901, 2
        %v1953 = vrot.slane %v1026, 2
        %v1954 = vsel %vm1921, %v1952, %v1953
        %v1955 = vrot.slane %v1902, 2
        %v1956 = vrot.slane %v1027, 2
        %v1957 = vsel %vm1921, %v1955, %v1956
        %v1958 = vrot.slane %v1903, 2
        %v1959 = vsel %vm1921, %v1953, %v1958
        %v1960 = vrot.slane %v1904, 2
        %v1961 = vsel %vm1921, %v1956, %v1960
        %s1978 = scalar_lea.vmem [#allocation9], 6
        %v1979 = vld [vmem:[%s1978] ss:$8 sm:$0x3]
        %v1981 = vperm.slane %v1979, 0
        %v1982 = vperm.slane %v1979, 1
        %v1985 = vmul.f32 %v1924, %v1981
        %v1986 = vmul.f32 %v1927, %v1982
        %v1987 = vmul.f32 %v1929, %v1981
        %v1988 = vmul.f32 %v1931, %v1982
        %v1989 = vmul.f32 %v1934, %v1981
        %v1990 = vmul.f32 %v1937, %v1982
        %v1991 = vmul.f32 %v1939, %v1981
        %v1992 = vmul.f32 %v1941, %v1982
        %v1993 = vmul.f32 %v1944, %v1981
        %v1994 = vmul.f32 %v1947, %v1982
        %v1995 = vmul.f32 %v1949, %v1981
        %v1996 = vmul.f32 %v1951, %v1982
        %v1997 = vmul.f32 %v1954, %v1981
        %v1998 = vmul.f32 %v1957, %v1982
        %v1999 = vmul.f32 %v1959, %v1981
        %v2000 = vmul.f32 %v1961, %v1982
        %v2001 = vadd.f32 %v1873, %v1985
        %v2002 = vadd.f32 %v1874, %v1986
        %v2003 = vadd.f32 %v1875, %v1987
        %v2004 = vadd.f32 %v1876, %v1988
        %v2005 = vadd.f32 %v1877, %v1989
        %v2006 = vadd.f32 %v1878, %v1990
        %v2007 = vadd.f32 %v1879, %v1991
        %v2008 = vadd.f32 %v1880, %v1992
        %v2009 = vadd.f32 %v1881, %v1993
        %v2010 = vadd.f32 %v1882, %v1994
        %v2011 = vadd.f32 %v1883, %v1995
        %v2012 = vadd.f32 %v1884, %v1996
        %v2013 = vadd.f32 %v1885, %v1997
        %v2014 = vadd.f32 %v1886, %v1998
        %v2015 = vadd.f32 %v1887, %v1999
        %v2016 = vadd.f32 %v1888, %v2000
        %v2017 = vld [vmem:[#allocation2 + $0x10] sm:$0xfc]
        %v2018 = vld [vmem:[#allocation2 + $0x40] sm:$0x3]
        %v2019 = vld [vmem:[#allocation2 + $0x58] sm:$0xfc]
        %v2020 = vld [vmem:[#allocation2 + $0x88] sm:$0x3]
        %v2021 = vld [vmem:[#allocation2 + $0xa0] sm:$0xfc]
        %v2022 = vld [vmem:[#allocation2 + $0xd0] sm:$0x3]
        %v2023 = vld [vmem:[#allocation2 + $0xe8] sm:$0xfc]
        %v2024 = vld [vmem:[#allocation2 + $0x118] sm:$0x3]
        %v2033 = vrot.slane %v2017, 2
        %v2034 = vrot.slane %v1067, 2
        %v2035 = vsel %vm1921, %v2033, %v2034
        %v2036 = vrot.slane %v2018, 2
        %v2037 = vsel %vm1921, %v2034, %v2036
        %v2038 = vrot.slane %v2019, 2
        %v2039 = vrot.slane %v1069, 2
        %v2040 = vsel %vm1921, %v2038, %v2039
        %v2041 = vrot.slane %v2020, 2
        %v2042 = vsel %vm1921, %v2039, %v2041
        %v2043 = vrot.slane %v2021, 2
        %v2044 = vrot.slane %v1071, 2
        %v2045 = vsel %vm1921, %v2043, %v2044
        %v2046 = vrot.slane %v2022, 2
        %v2047 = vsel %vm1921, %v2044, %v2046
        %v2048 = vrot.slane %v2023, 2
        %v2049 = vrot.slane %v1073, 2
        %v2050 = vsel %vm1921, %v2048, %v2049
        %v2051 = vrot.slane %v2024, 2
        %v2052 = vsel %vm1921, %v2049, %v2051
        %s2061 = scalar_lea.vmem [#allocation9], 7
        %v2062 = vld [vmem:[%s2061] ss:$8 sm:$0x3]
        %v2064 = vperm.slane %v2062, 0
        %v2065 = vperm.slane %v2062, 1
        %2066 = vrot.lane.b32.xlu0 %v2064, 16
        %v2067 = vpop.permute.xlu0 %2066
        %2068 = vrot.lane.b32.xlu0 %v2065, 16
        %v2069 = vpop.permute.xlu0 %2068
        %v2070 = vsel %vm732, %v2067, %v2069
        %v2074 = vmul.f32 %v1924, %v2067
        %v2075 = vmul.f32 %v1927, %v2070
        %v2076 = vmul.f32 %v2035, %v2069
        %v2077 = vmul.f32 %v1929, %v2067
        %v2078 = vmul.f32 %v1931, %v2070
        %v2079 = vmul.f32 %v2037, %v2069
        %v2080 = vmul.f32 %v1934, %v2067
        %v2081 = vmul.f32 %v1937, %v2070
        %v2082 = vmul.f32 %v2040, %v2069
        %v2083 = vmul.f32 %v1939, %v2067
        %v2084 = vmul.f32 %v1941, %v2070
        %v2085 = vmul.f32 %v2042, %v2069
        %v2086 = vmul.f32 %v1944, %v2067
        %v2087 = vmul.f32 %v1947, %v2070
        %v2088 = vmul.f32 %v2045, %v2069
        %v2089 = vmul.f32 %v1949, %v2067
        %v2090 = vmul.f32 %v1951, %v2070
        %v2091 = vmul.f32 %v2047, %v2069
        %v2092 = vmul.f32 %v1954, %v2067
        %v2093 = vmul.f32 %v1957, %v2070
        %v2094 = vmul.f32 %v2050, %v2069
        %v2095 = vmul.f32 %v1959, %v2067
        %v2096 = vmul.f32 %v1961, %v2070
        %v2097 = vmul.f32 %v2052, %v2069
        %2122 = vrot.lane.b32.xlu0 %v2074, 112
        %v2123 = vpop.permute.xlu0 %2122
        %2124 = vrot.lane.b32.xlu0 %v2075, 112
        %v2125 = vpop.permute.xlu0 %2124
        %2126 = vrot.lane.b32.xlu0 %v2076, 112
        %v2127 = vpop.permute.xlu0 %2126
        %2128 = vrot.lane.b32.xlu0 %v2077, 112
        %v2129 = vpop.permute.xlu0 %2128
        %2130 = vrot.lane.b32.xlu0 %v2078, 112
        %v2131 = vpop.permute.xlu0 %2130
        %2132 = vrot.lane.b32.xlu0 %v2079, 112
        %v2133 = vpop.permute.xlu0 %2132
        %2134 = vrot.lane.b32.xlu0 %v2080, 112
        %v2135 = vpop.permute.xlu0 %2134
        %2136 = vrot.lane.b32.xlu0 %v2081, 112
        %v2137 = vpop.permute.xlu0 %2136
        %2138 = vrot.lane.b32.xlu0 %v2082, 112
        %v2139 = vpop.permute.xlu0 %2138
        %2140 = vrot.lane.b32.xlu0 %v2083, 112
        %v2141 = vpop.permute.xlu0 %2140
        %2142 = vrot.lane.b32.xlu0 %v2084, 112
        %v2143 = vpop.permute.xlu0 %2142
        %2144 = vrot.lane.b32.xlu0 %v2085, 112
        %v2145 = vpop.permute.xlu0 %2144
        %2146 = vrot.lane.b32.xlu0 %v2086, 112
        %v2147 = vpop.permute.xlu0 %2146
        %2148 = vrot.lane.b32.xlu0 %v2087, 112
        %v2149 = vpop.permute.xlu0 %2148
        %2150 = vrot.lane.b32.xlu0 %v2088, 112
        %v2151 = vpop.permute.xlu0 %2150
        %2152 = vrot.lane.b32.xlu0 %v2089, 112
        %v2153 = vpop.permute.xlu0 %2152
        %2154 = vrot.lane.b32.xlu0 %v2090, 112
        %v2155 = vpop.permute.xlu0 %2154
        %2156 = vrot.lane.b32.xlu0 %v2091, 112
        %v2157 = vpop.permute.xlu0 %2156
        %2158 = vrot.lane.b32.xlu0 %v2092, 112
        %v2159 = vpop.permute.xlu0 %2158
        %2160 = vrot.lane.b32.xlu0 %v2093, 112
        %v2161 = vpop.permute.xlu0 %2160
        %2162 = vrot.lane.b32.xlu0 %v2094, 112
        %v2163 = vpop.permute.xlu0 %2162
        %2164 = vrot.lane.b32.xlu0 %v2095, 112
        %v2165 = vpop.permute.xlu0 %2164
        %2166 = vrot.lane.b32.xlu0 %v2096, 112
        %v2167 = vpop.permute.xlu0 %2166
        %2168 = vrot.lane.b32.xlu0 %v2097, 112
        %v2169 = vpop.permute.xlu0 %2168
        %v2170 = vsel %vm1183, %v2123, %v2125
        %v2171 = vsel %vm1183, %v2125, %v2127
        %v2172 = vsel %vm1183, %v2129, %v2131
        %v2173 = vsel %vm1183, %v2131, %v2133
        %v2174 = vsel %vm1183, %v2135, %v2137
        %v2175 = vsel %vm1183, %v2137, %v2139
        %v2176 = vsel %vm1183, %v2141, %v2143
        %v2177 = vsel %vm1183, %v2143, %v2145
        %v2178 = vsel %vm1183, %v2147, %v2149
        %v2179 = vsel %vm1183, %v2149, %v2151
        %v2180 = vsel %vm1183, %v2153, %v2155
        %v2181 = vsel %vm1183, %v2155, %v2157
        %v2182 = vsel %vm1183, %v2159, %v2161
        %v2183 = vsel %vm1183, %v2161, %v2163
        %v2184 = vsel %vm1183, %v2165, %v2167
        %v2185 = vsel %vm1183, %v2167, %v2169
        %v2202 = vadd.f32 %v2001, %v2170
        %v2203 = vadd.f32 %v2002, %v2171
        %v2204 = vadd.f32 %v2003, %v2172
        %v2205 = vadd.f32 %v2004, %v2173
        %v2206 = vadd.f32 %v2005, %v2174
        %v2207 = vadd.f32 %v2006, %v2175
        %v2208 = vadd.f32 %v2007, %v2176
        %v2209 = vadd.f32 %v2008, %v2177
        %v2210 = vadd.f32 %v2009, %v2178
        %v2211 = vadd.f32 %v2010, %v2179
        %v2212 = vadd.f32 %v2011, %v2180
        %v2213 = vadd.f32 %v2012, %v2181
        %v2214 = vadd.f32 %v2013, %v2182
        %v2215 = vadd.f32 %v2014, %v2183
        %v2216 = vadd.f32 %v2015, %v2184
        %v2217 = vadd.f32 %v2016, %v2185
        %s2218 = scalar_lea.vmem [#allocation9], 16
        %v2219 = vld [vmem:[%s2218] ss:$8 sm:$0x3]
        %v2221 = vperm.slane %v2219, 0
        %v2222 = vperm.slane %v2219, 1
        %2223 = vrot.lane.b32.xlu0 %v2221, 32
        %v2224 = vpop.permute.xlu0 %2223
        %2225 = vrot.lane.b32.xlu0 %v2222, 32
        %v2226 = vpop.permute.xlu0 %2225
        %v2227 = vsel %vm1241, %v2224, %v2226
        %v2231 = vmul.f32 %v1924, %v2224
        %v2232 = vmul.f32 %v1927, %v2227
        %v2233 = vmul.f32 %v2035, %v2226
        %v2234 = vmul.f32 %v1929, %v2224
        %v2235 = vmul.f32 %v1931, %v2227
        %v2236 = vmul.f32 %v2037, %v2226
        %v2237 = vmul.f32 %v1934, %v2224
        %v2238 = vmul.f32 %v1937, %v2227
        %v2239 = vmul.f32 %v2040, %v2226
        %v2240 = vmul.f32 %v1939, %v2224
        %v2241 = vmul.f32 %v1941, %v2227
        %v2242 = vmul.f32 %v2042, %v2226
        %v2243 = vmul.f32 %v1944, %v2224
        %v2244 = vmul.f32 %v1947, %v2227
        %v2245 = vmul.f32 %v2045, %v2226
        %v2246 = vmul.f32 %v1949, %v2224
        %v2247 = vmul.f32 %v1951, %v2227
        %v2248 = vmul.f32 %v2047, %v2226
        %v2249 = vmul.f32 %v1954, %v2224
        %v2250 = vmul.f32 %v1957, %v2227
        %v2251 = vmul.f32 %v2050, %v2226
        %v2252 = vmul.f32 %v1959, %v2224
        %v2253 = vmul.f32 %v1961, %v2227
        %v2254 = vmul.f32 %v2052, %v2226
        %2279 = vrot.lane.b32.xlu0 %v2231, 96
        %v2280 = vpop.permute.xlu0 %2279
        %2281 = vrot.lane.b32.xlu0 %v2232, 96
        %v2282 = vpop.permute.xlu0 %2281
        %2283 = vrot.lane.b32.xlu0 %v2233, 96
        %v2284 = vpop.permute.xlu0 %2283
        %2285 = vrot.lane.b32.xlu0 %v2234, 96
        %v2286 = vpop.permute.xlu0 %2285
        %2287 = vrot.lane.b32.xlu0 %v2235, 96
        %v2288 = vpop.permute.xlu0 %2287
        %2289 = vrot.lane.b32.xlu0 %v2236, 96
        %v2290 = vpop.permute.xlu0 %2289
        %2291 = vrot.lane.b32.xlu0 %v2237, 96
        %v2292 = vpop.permute.xlu0 %2291
        %2293 = vrot.lane.b32.xlu0 %v2238, 96
        %v2294 = vpop.permute.xlu0 %2293
        %2295 = vrot.lane.b32.xlu0 %v2239, 96
        %v2296 = vpop.permute.xlu0 %2295
        %2297 = vrot.lane.b32.xlu0 %v2240, 96
        %v2298 = vpop.permute.xlu0 %2297
        %2299 = vrot.lane.b32.xlu0 %v2241, 96
        %v2300 = vpop.permute.xlu0 %2299
        %2301 = vrot.lane.b32.xlu0 %v2242, 96
        %v2302 = vpop.permute.xlu0 %2301
        %2303 = vrot.lane.b32.xlu0 %v2243, 96
        %v2304 = vpop.permute.xlu0 %2303
        %2305 = vrot.lane.b32.xlu0 %v2244, 96
        %v2306 = vpop.permute.xlu0 %2305
        %2307 = vrot.lane.b32.xlu0 %v2245, 96
        %v2308 = vpop.permute.xlu0 %2307
        %2309 = vrot.lane.b32.xlu0 %v2246, 96
        %v2310 = vpop.permute.xlu0 %2309
        %2311 = vrot.lane.b32.xlu0 %v2247, 96
        %v2312 = vpop.permute.xlu0 %2311
        %2313 = vrot.lane.b32.xlu0 %v2248, 96
        %v2314 = vpop.permute.xlu0 %2313
        %2315 = vrot.lane.b32.xlu0 %v2249, 96
        %v2316 = vpop.permute.xlu0 %2315
        %2317 = vrot.lane.b32.xlu0 %v2250, 96
        %v2318 = vpop.permute.xlu0 %2317
        %2319 = vrot.lane.b32.xlu0 %v2251, 96
        %v2320 = vpop.permute.xlu0 %2319
        %2321 = vrot.lane.b32.xlu0 %v2252, 96
        %v2322 = vpop.permute.xlu0 %2321
        %2323 = vrot.lane.b32.xlu0 %v2253, 96
        %v2324 = vpop.permute.xlu0 %2323
        %2325 = vrot.lane.b32.xlu0 %v2254, 96
        %v2326 = vpop.permute.xlu0 %2325
        %v2327 = vsel %vm1342, %v2280, %v2282
        %v2328 = vsel %vm1342, %v2282, %v2284
        %v2329 = vsel %vm1342, %v2286, %v2288
        %v2330 = vsel %vm1342, %v2288, %v2290
        %v2331 = vsel %vm1342, %v2292, %v2294
        %v2332 = vsel %vm1342, %v2294, %v2296
        %v2333 = vsel %vm1342, %v2298, %v2300
        %v2334 = vsel %vm1342, %v2300, %v2302
        %v2335 = vsel %vm1342, %v2304, %v2306
        %v2336 = vsel %vm1342, %v2306, %v2308
        %v2337 = vsel %vm1342, %v2310, %v2312
        %v2338 = vsel %vm1342, %v2312, %v2314
        %v2339 = vsel %vm1342, %v2316, %v2318
        %v2340 = vsel %vm1342, %v2318, %v2320
        %v2341 = vsel %vm1342, %v2322, %v2324
        %v2342 = vsel %vm1342, %v2324, %v2326
        %v2359 = vadd.f32 %v2202, %v2327
        %v2360 = vadd.f32 %v2203, %v2328
        %v2361 = vadd.f32 %v2204, %v2329
        %v2362 = vadd.f32 %v2205, %v2330
        %v2363 = vadd.f32 %v2206, %v2331
        %v2364 = vadd.f32 %v2207, %v2332
        %v2365 = vadd.f32 %v2208, %v2333
        %v2366 = vadd.f32 %v2209, %v2334
        %v2367 = vadd.f32 %v2210, %v2335
        %v2368 = vadd.f32 %v2211, %v2336
        %v2369 = vadd.f32 %v2212, %v2337
        %v2370 = vadd.f32 %v2213, %v2338
        %v2371 = vadd.f32 %v2214, %v2339
        %v2372 = vadd.f32 %v2215, %v2340
        %v2373 = vadd.f32 %v2216, %v2341
        %v2374 = vadd.f32 %v2217, %v2342
        %v2375 = vld [vmem:[%s4] sm:$0x3]
        %v2377 = vperm.slane %v2375, 0
        %v2378 = vperm.slane %v2375, 1
        %v2381 = vadd.f32 %v2359, %v2377
        %v2382 = vadd.f32 %v2360, %v2378
        %v2383 = vadd.f32 %v2361, %v2377
        %v2384 = vadd.f32 %v2362, %v2378
        %v2385 = vadd.f32 %v2363, %v2377
        %v2386 = vadd.f32 %v2364, %v2378
        %v2387 = vadd.f32 %v2365, %v2377
        %v2388 = vadd.f32 %v2366, %v2378
        %v2389 = vadd.f32 %v2367, %v2377
        %v2390 = vadd.f32 %v2368, %v2378
        %v2391 = vadd.f32 %v2369, %v2377
        %v2392 = vadd.f32 %v2370, %v2378
        %v2393 = vadd.f32 %v2371, %v2377
        %v2394 = vadd.f32 %v2372, %v2378
        %v2395 = vadd.f32 %v2373, %v2377
        %v2396 = vadd.f32 %v2374, %v2378
        %vm2397 = vcmp.gt.f32.partialorder %v2381, 0.0
        %vm2398 = vcmp.gt.f32.partialorder %v2382, 0.0
        %vm2399 = vcmp.gt.f32.partialorder %v2383, 0.0
        %vm2400 = vcmp.gt.f32.partialorder %v2384, 0.0
        %vm2401 = vcmp.gt.f32.partialorder %v2385, 0.0
        %vm2402 = vcmp.gt.f32.partialorder %v2386, 0.0
        %vm2403 = vcmp.gt.f32.partialorder %v2387, 0.0
        %vm2404 = vcmp.gt.f32.partialorder %v2388, 0.0
        %vm2405 = vcmp.gt.f32.partialorder %v2389, 0.0
        %vm2406 = vcmp.gt.f32.partialorder %v2390, 0.0
        %vm2407 = vcmp.gt.f32.partialorder %v2391, 0.0
        %vm2408 = vcmp.gt.f32.partialorder %v2392, 0.0
        %vm2409 = vcmp.gt.f32.partialorder %v2393, 0.0
        %vm2410 = vcmp.gt.f32.partialorder %v2394, 0.0
        %vm2411 = vcmp.gt.f32.partialorder %v2395, 0.0
        %vm2412 = vcmp.gt.f32.partialorder %v2396, 0.0
        %v2413 = vmin.f32 %v2381, 0.0
        %v2414 = vmin.f32 %v2382, 0.0
        %v2415 = vmin.f32 %v2383, 0.0
        %v2416 = vmin.f32 %v2384, 0.0
        %v2417 = vmin.f32 %v2385, 0.0
        %v2418 = vmin.f32 %v2386, 0.0
        %v2419 = vmin.f32 %v2387, 0.0
        %v2420 = vmin.f32 %v2388, 0.0
        %v2421 = vmin.f32 %v2389, 0.0
        %v2422 = vmin.f32 %v2390, 0.0
        %v2423 = vmin.f32 %v2391, 0.0
        %v2424 = vmin.f32 %v2392, 0.0
        %v2425 = vmin.f32 %v2393, 0.0
        %v2426 = vmin.f32 %v2394, 0.0
        %v2427 = vmin.f32 %v2395, 0.0
        %v2428 = vmin.f32 %v2396, 0.0
        %v2429 = vmul.f32 %v2413, 1.442695
        %v2430 = vpow.pop %v2429
        %v2431 = vmul.f32 %v2414, 1.442695
        %v2432 = vpow.pop %v2431
        %v2433 = vmul.f32 %v2415, 1.442695
        %v2434 = vpow.pop %v2433
        %v2435 = vmul.f32 %v2416, 1.442695
        %v2436 = vpow.pop %v2435
        %v2437 = vmul.f32 %v2417, 1.442695
        %v2438 = vpow.pop %v2437
        %v2439 = vmul.f32 %v2418, 1.442695
        %v2440 = vpow.pop %v2439
        %v2441 = vmul.f32 %v2419, 1.442695
        %v2442 = vpow.pop %v2441
        %v2443 = vmul.f32 %v2420, 1.442695
        %v2444 = vpow.pop %v2443
        %v2445 = vmul.f32 %v2421, 1.442695
        %v2446 = vpow.pop %v2445
        %v2447 = vmul.f32 %v2422, 1.442695
        %v2448 = vpow.pop %v2447
        %v2449 = vmul.f32 %v2423, 1.442695
        %v2450 = vpow.pop %v2449
        %v2451 = vmul.f32 %v2424, 1.442695
        %v2452 = vpow.pop %v2451
        %v2453 = vmul.f32 %v2425, 1.442695
        %v2454 = vpow.pop %v2453
        %v2455 = vmul.f32 %v2426, 1.442695
        %v2456 = vpow.pop %v2455
        %v2457 = vmul.f32 %v2427, 1.442695
        %v2458 = vpow.pop %v2457
        %v2459 = vmul.f32 %v2428, 1.442695
        %v2460 = vpow.pop %v2459
        %v2461 = vsub.f32 %v2430, 1.0
        %v2462 = vsub.f32 %v2432, 1.0
        %v2463 = vsub.f32 %v2434, 1.0
        %v2464 = vsub.f32 %v2436, 1.0
        %v2465 = vsub.f32 %v2438, 1.0
        %v2466 = vsub.f32 %v2440, 1.0
        %v2467 = vsub.f32 %v2442, 1.0
        %v2468 = vsub.f32 %v2444, 1.0
        %v2469 = vsub.f32 %v2446, 1.0
        %v2470 = vsub.f32 %v2448, 1.0
        %v2471 = vsub.f32 %v2450, 1.0
        %v2472 = vsub.f32 %v2452, 1.0
        %v2473 = vsub.f32 %v2454, 1.0
        %v2474 = vsub.f32 %v2456, 1.0
        %v2475 = vsub.f32 %v2458, 1.0
        %v2476 = vsub.f32 %v2460, 1.0
        %v2477 = vsel %vm2397, %v2381, %v2461
        %v2478 = vsel %vm2398, %v2382, %v2462
        %v2479 = vsel %vm2399, %v2383, %v2463
        %v2480 = vsel %vm2400, %v2384, %v2464
        %v2481 = vsel %vm2401, %v2385, %v2465
        %v2482 = vsel %vm2402, %v2386, %v2466
        %v2483 = vsel %vm2403, %v2387, %v2467
        %v2484 = vsel %vm2404, %v2388, %v2468
        %v2485 = vsel %vm2405, %v2389, %v2469
        %v2486 = vsel %vm2406, %v2390, %v2470
        %v2487 = vsel %vm2407, %v2391, %v2471
        %v2488 = vsel %vm2408, %v2392, %v2472
        %v2489 = vsel %vm2409, %v2393, %v2473
        %v2490 = vsel %vm2410, %v2394, %v2474
        %v2491 = vsel %vm2411, %v2395, %v2475
        %v2492 = vsel %vm2412, %v2396, %v2476
        %v2493 = vld [vmem:[#allocation11] sm:$0xff]
        %v2494 = vld [vmem:[#allocation11 + $0x8] sm:$0xff]
        %v2495 = vld [vmem:[#allocation11 + $0x10] sm:$0xff]
        %v2496 = vld [vmem:[#allocation11 + $0x18] sm:$0xff]
        %v2497 = vld [vmem:[#allocation11 + $0x20] sm:$0xff]
        %v2498 = vld [vmem:[#allocation11 + $0x28] sm:$0xff]
        %v2499 = vld [vmem:[#allocation11 + $0x30] sm:$0xff]
        %v2500 = vld [vmem:[#allocation11 + $0x38] sm:$0xff]
        %v2501 = vld [vmem:[#allocation11 + $0x40] sm:$0xff]
        %v2502 = vld [vmem:[#allocation11 + $0x48] sm:$0xff]
        %v2503 = vld [vmem:[#allocation11 + $0x50] sm:$0xff]
        %v2504 = vld [vmem:[#allocation11 + $0x58] sm:$0xff]
        %v2505 = vld [vmem:[#allocation11 + $0x60] sm:$0xff]
        %v2506 = vld [vmem:[#allocation11 + $0x68] sm:$0xff]
        %v2507 = vld [vmem:[#allocation11 + $0x70] sm:$0xff]
        %v2508 = vld [vmem:[#allocation11 + $0x78] sm:$0xff]
        %v2509 = vld [vmem:[#allocation11 + $0x80] sm:$0xff]
        %v2510 = vld [vmem:[#allocation11 + $0x88] sm:$0xff]
        %v2511 = vld [vmem:[#allocation11 + $0x90] sm:$0xff]
        %v2512 = vld [vmem:[#allocation11 + $0x98] sm:$0xff]
        %v2513 = vld [vmem:[#allocation11 + $0xa0] sm:$0xff]
        %v2514 = vld [vmem:[#allocation11 + $0xa8] sm:$0xff]
        %v2515 = vld [vmem:[#allocation11 + $0xb0] sm:$0xff]
        %v2516 = vld [vmem:[#allocation11 + $0xb8] sm:$0xff]
        %v2517 = vld [vmem:[#allocation11 + $0xc0] sm:$0xff]
        %v2518 = vld [vmem:[#allocation11 + $0xc8] sm:$0xff]
        %v2519 = vld [vmem:[#allocation11 + $0xd0] sm:$0xff]
        %v2520 = vld [vmem:[#allocation11 + $0xd8] sm:$0xff]
        %v2521 = vld [vmem:[#allocation11 + $0xe0] sm:$0xff]
        %v2522 = vld [vmem:[#allocation11 + $0xe8] sm:$0xff]
        %v2523 = vld [vmem:[#allocation11 + $0xf0] sm:$0xff]
        %v2524 = vld [vmem:[#allocation11 + $0xf8] sm:$0xff]
        %v2525 = vld [vmem:[#allocation12] sm:$0xff]
        %v2526 = vld [vmem:[#allocation12 + $0x8] sm:$0xff]
        %v2527 = vld [vmem:[#allocation12 + $0x10] sm:$0xff]
        %v2528 = vld [vmem:[#allocation12 + $0x18] sm:$0xff]
        %v2529 = vld [vmem:[#allocation12 + $0x20] sm:$0xff]
        %v2530 = vld [vmem:[#allocation12 + $0x28] sm:$0xff]
        %v2531 = vld [vmem:[#allocation12 + $0x30] sm:$0xff]
        %v2532 = vld [vmem:[#allocation12 + $0x38] sm:$0xff]
        %2533 = vmatpush.msra.mxu0 0.0
        %2534 = vmatpush.msra.mxu0 0.0
        %2535 = vmatpush.msra.mxu0 0.0
        %2536 = vmatpush.msra.mxu0 0.0
        %2537 = vmatpush.msra.mxu0 0.0
        %2538 = vmatpush.msra.mxu0 0.0
        %2539 = vmatpush.msra.mxu0 0.0
        %2540 = vmatpush.msra.mxu0 0.0
        %2541 = vmatpush.msra.mxu0 %v2532
        %2542 = vmatpush.msra.mxu0 %v2531
        %2543 = vmatpush.msra.mxu0 %v2530
        %2544 = vmatpush.msra.mxu0 %v2529
        %2545 = vmatpush.msra.mxu0 %v2528
        %2546 = vmatpush.msra.mxu0 %v2527
        %2547 = vmatpush.msra.mxu0 %v2526
        %2548 = vmatpush.msra.mxu0 %v2525
        %2549 = vmatmul.f32.gmra.mxu0 %v442
        %v2550 = vpop.f32.mrf.mxu0
        %v2551 = vadd.f32 0.0, %v2550
        %2552 = vmatmul.f32.gmra.mxu0 %v445
        %v2553 = vpop.f32.mrf.mxu0
        %v2554 = vadd.f32 0.0, %v2553
        %2555 = vmatmul.f32.gmra.mxu0 %v448
        %v2556 = vpop.f32.mrf.mxu0
        %v2557 = vadd.f32 0.0, %v2556
        %2558 = vmatmul.f32.gmra.mxu0 %v451
        %v2559 = vpop.f32.mrf.mxu0
        %v2560 = vadd.f32 0.0, %v2559
        %2561 = vmatmul.f32.gmra.mxu0 %v454
        %v2562 = vpop.f32.mrf.mxu0
        %v2563 = vadd.f32 0.0, %v2562
        %2564 = vmatmul.f32.gmra.mxu0 %v457
        %v2565 = vpop.f32.mrf.mxu0
        %v2566 = vadd.f32 0.0, %v2565
        %2567 = vmatmul.f32.gmra.mxu0 %v460
        %v2568 = vpop.f32.mrf.mxu0
        %v2569 = vadd.f32 0.0, %v2568
        %2570 = vmatmul.f32.gmra.mxu0 %v463
        %v2571 = vpop.f32.mrf.mxu0
        %v2572 = vadd.f32 0.0, %v2571
        %2573 = vdwg.mxu0
        %2574 = vmatpush.msra.mxu0 %v2508
        %2575 = vmatpush.msra.mxu0 %v2507
        %2576 = vmatpush.msra.mxu0 %v2506
        %2577 = vmatpush.msra.mxu0 %v2505
        %2578 = vmatpush.msra.mxu0 %v2504
        %2579 = vmatpush.msra.mxu0 %v2503
        %2580 = vmatpush.msra.mxu0 %v2502
        %2581 = vmatpush.msra.mxu0 %v2501
        %2582 = vmatpush.msra.mxu0 %v2500
        %2583 = vmatpush.msra.mxu0 %v2499
        %2584 = vmatpush.msra.mxu0 %v2498
        %2585 = vmatpush.msra.mxu0 %v2497
        %2586 = vmatpush.msra.mxu0 %v2496
        %2587 = vmatpush.msra.mxu0 %v2495
        %2588 = vmatpush.msra.mxu0 %v2494
        %2589 = vmatpush.msra.mxu0 %v2493
        %2590 = vmatmul.f32.gmra.mxu0 %v2477
        %v2591 = vpop.f32.mrf.mxu0
        %v2592 = vadd.f32 %v2551, %v2591
        %2593 = vmatmul.f32.gmra.mxu0 %v2479
        %v2594 = vpop.f32.mrf.mxu0
        %v2595 = vadd.f32 %v2554, %v2594
        %2596 = vmatmul.f32.gmra.mxu0 %v2481
        %v2597 = vpop.f32.mrf.mxu0
        %v2598 = vadd.f32 %v2557, %v2597
        %2599 = vmatmul.f32.gmra.mxu0 %v2483
        %v2600 = vpop.f32.mrf.mxu0
        %v2601 = vadd.f32 %v2560, %v2600
        %2602 = vmatmul.f32.gmra.mxu0 %v2485
        %v2603 = vpop.f32.mrf.mxu0
        %v2604 = vadd.f32 %v2563, %v2603
        %2605 = vmatmul.f32.gmra.mxu0 %v2487
        %v2606 = vpop.f32.mrf.mxu0
        %v2607 = vadd.f32 %v2566, %v2606
        %2608 = vmatmul.f32.gmra.mxu0 %v2489
        %v2609 = vpop.f32.mrf.mxu0
        %v2610 = vadd.f32 %v2569, %v2609
        %2611 = vmatmul.f32.gmra.mxu0 %v2491
        %v2612 = vpop.f32.mrf.mxu0
        %v2613 = vadd.f32 %v2572, %v2612
        %2614 = vdwg.mxu0
        %2615 = vmatpush.msra.mxu0 %v2524
        %2616 = vmatpush.msra.mxu0 %v2523
        %2617 = vmatpush.msra.mxu0 %v2522
        %2618 = vmatpush.msra.mxu0 %v2521
        %2619 = vmatpush.msra.mxu0 %v2520
        %2620 = vmatpush.msra.mxu0 %v2519
        %2621 = vmatpush.msra.mxu0 %v2518
        %2622 = vmatpush.msra.mxu0 %v2517
        %2623 = vmatpush.msra.mxu0 %v2516
        %2624 = vmatpush.msra.mxu0 %v2515
        %2625 = vmatpush.msra.mxu0 %v2514
        %2626 = vmatpush.msra.mxu0 %v2513
        %2627 = vmatpush.msra.mxu0 %v2512
        %2628 = vmatpush.msra.mxu0 %v2511
        %2629 = vmatpush.msra.mxu0 %v2510
        %2630 = vmatpush.msra.mxu0 %v2509
        %2631 = vmatmul.f32.gmra.mxu0 %v2478
        %v2632 = vpop.f32.mrf.mxu0
        %v2633 = vadd.f32 %v2592, %v2632
        %2634 = vmatmul.f32.gmra.mxu0 %v2480
        %v2635 = vpop.f32.mrf.mxu0
        %v2636 = vadd.f32 %v2595, %v2635
        %2637 = vmatmul.f32.gmra.mxu0 %v2482
        %v2638 = vpop.f32.mrf.mxu0
        %v2639 = vadd.f32 %v2598, %v2638
        %2640 = vmatmul.f32.gmra.mxu0 %v2484
        %v2641 = vpop.f32.mrf.mxu0
        %v2642 = vadd.f32 %v2601, %v2641
        %2643 = vmatmul.f32.gmra.mxu0 %v2486
        %v2644 = vpop.f32.mrf.mxu0
        %v2645 = vadd.f32 %v2604, %v2644
        %2646 = vmatmul.f32.gmra.mxu0 %v2488
        %v2647 = vpop.f32.mrf.mxu0
        %v2648 = vadd.f32 %v2607, %v2647
        %2649 = vmatmul.f32.gmra.mxu0 %v2490
        %v2650 = vpop.f32.mrf.mxu0
        %v2651 = vadd.f32 %v2610, %v2650
        %2652 = vmatmul.f32.gmra.mxu0 %v2492
        %v2653 = vpop.f32.mrf.mxu0
        %v2654 = vadd.f32 %v2613, %v2653
        %2655 = vdwg.mxu0
        %v2656 = vld [vmem:[%s7] sm:$0x1]
        %v2658 = vperm.slane %v2656, 0
        %v2660 = vadd.f32 %v2633, %v2658
        %v2661 = vadd.f32 %v2636, %v2658
        %v2662 = vadd.f32 %v2639, %v2658
        %v2663 = vadd.f32 %v2642, %v2658
        %v2664 = vadd.f32 %v2645, %v2658
        %v2665 = vadd.f32 %v2648, %v2658
        %v2666 = vadd.f32 %v2651, %v2658
        %v2667 = vadd.f32 %v2654, %v2658
        %2668 = vst [vmem:[%s407] sm:$0xff] %v2660
        %2669 = vst [vmem:[%s407 + $0x8] sm:$0xff] %v2661
        %2670 = vst [vmem:[%s407 + $0x10] sm:$0xff] %v2662
        %2671 = vst [vmem:[%s407 + $0x18] sm:$0xff] %v2663
        %2672 = vst [vmem:[%s407 + $0x20] sm:$0xff] %v2664
        %2673 = vst [vmem:[%s407 + $0x28] sm:$0xff] %v2665
        %2674 = vst [vmem:[%s407 + $0x30] sm:$0xff] %v2666
        %2675 = vst [vmem:[%s407 + $0x38] sm:$0xff] %v2667
        %s2676 = sand.u32 %s209, 1
        %s2677 = scalar_lea.sflag [#allocation5], %s2676
        %s2678 = sand.u32 %s209, 1
        %s2679 = smul.addr %s2678, 64
        %s2680 = scalar_lea.vmem [#allocation14], %s2679
        // Predicated region
        $region77: #{tpu_custom_call.1} parent=51 // pred_check
          %p2681 = pneg %p219
        $region78: #{tpu_custom_call.1} parent=51 // pred_check_branch
          %2683 = sbr.rel (%p2681) target = $region80
        $region79: #{tpu_custom_call.1} parent=51 // pred_region
          %s2684 = smul.u32 4, %s28
          %2686 = vsyncadd %s2677, 0
          %s2687 = smul.addr %s2684, 2
          %s2688 = smul.addr %s2687, 8
          %s2689 = scalar_lea.hbm %s8, %s2688
          %s2690 = sshll.u32 %s2680, 4
          %s2691 = int_to_ptr.vmem [resolvable:$true] %s2690
          %s2692 = sshll.u32 %s2689, 4
          %s2693 = int_to_ptr.hbm [resolvable:$true] %s2692
          %2698 = dma.vmem_to_hbm [thread:$0]  %s2691, 1024, %s2693, %s2677, 128, 128, 8
        $region80: #{tpu_custom_call.1} parent=51 // pred_fallthru
          _
      $region52: #{tpu_custom_call.1} parent=5 // pred_fallthru
        _
      %p2699 = scmp.le.s32.totalorder 2, %s23
      // Predicated region
      $region81: #{tpu_custom_call.1} parent=5 // pred_check
        %p2700 = pneg %p2699
      $region82: #{tpu_custom_call.1} parent=5 // pred_check_branch
        %2702 = sbr.rel (%p2700) target = $region84
      $region83: #{tpu_custom_call.1} parent=5 // pred_region
        %s2703 = ssub.s32 %s23, 2
        // Predicated region
        $region85: #{tpu_custom_call.1} parent=83 // pred_check
          %p2704 = pneg %p225
        $region86: #{tpu_custom_call.1} parent=83 // pred_check_branch
          %2706 = sbr.rel (%p2704) target = $region88
        $region87: #{tpu_custom_call.1} parent=83 // pred_region
          %s2707 = sand.u32 %s210, 1
          %s2708 = scalar_lea.sflag [#allocation5], %s2707
          %s2709 = sand.u32 %s210, 1
          %s2710 = smul.addr %s2709, 64
          %s2711 = scalar_lea.vmem [#allocation14], %s2710
          %2713 = dma.done %s2708, 1024
        $region88: #{tpu_custom_call.1} parent=83 // pred_fallthru
          _
      $region84: #{tpu_custom_call.1} parent=5 // pred_fallthru
        _
    $region6: #{tpu_custom_call.1} parent=1 // loop_footer
      %s27 = sadd.s32 1, %s23
    $region7: #{tpu_custom_call.1} parent=1 // loop_footer_branch
      %22 = sbr.rel target = $region3
    $region8: #{tpu_custom_call.1} parent=1 // loop_exit
      _
    %2714 = vsyncpa [#allocation4], 1
    %s2715 = scalar_lea.sflag [#allocation4], 1
    %2716 = vsyncpa %s2715, 1
    %2717 = vsyncpa [#allocation7], 1
    %2718 = vsyncpa [#allocation10], 1
    %2719 = vsyncpa [#allocation13], 1
    %2720 = vsyncpa [#allocation5], 1
    %s2721 = scalar_lea.sflag [#allocation5], 1
    %2722 = vsyncpa %s2721, 1

</llo_original>
